<compile_context>
chip_gen: v7x
topology: tpu7x:2x2x1
jax: 0.10.0
libtpu: 0.0.40
codegen_flags: <defaults>
</compile_context>

<pallas_src>
import jax
import jax.numpy as jnp
from jax.experimental import pallas as pl
from jax.experimental.pallas import tpu as pltpu

IN_DIM = 768
HIDDEN = 1024
OUT_DIM = 2
NEG_SLOPE = 0.01  # nn.LeakyReLU default


# --------------------------------------------------------------------------
# Fused  y = LeakyReLU(x @ W1 + b1) @ W2 + b2  kernel.
# Grid = (batch tiles [parallel], hidden tiles [reduction/arbitrary]).
# Layer-2 partials accumulate in an f32 VMEM scratch; the (tb, 2) output block
# is stored exactly once per batch tile.
# --------------------------------------------------------------------------
def _fused_mlp_kernel(x_ref, w1_ref, b1_ref, w2_ref, b2_ref, o_ref, acc_ref):
    j = pl.program_id(1)

    @pl.when(j == 0)
    def _init():
        # Seed the accumulator with the layer-2 bias.
        acc_ref[...] = jnp.broadcast_to(b2_ref[...], acc_ref.shape)

    # ---- layer 1 on this (batch, hidden) tile: bf16 x bf16 -> f32 accumulation
    h = jnp.dot(x_ref[...], w1_ref[...], preferred_element_type=jnp.float32)
    h = h + b1_ref[...]
    h = jnp.where(h >= 0, h, NEG_SLOPE * h)          # LeakyReLU (f32)

    # ---- layer 2 partial product (h kept in f32, W2 is f32 -> better numerics)
    acc_ref[...] += jnp.dot(h, w2_ref[...], preferred_element_type=jnp.float32)

    @pl.when(j == pl.num_programs(1) - 1)
    def _store():
        # Single lane-narrow store per batch tile (no per-step RMW on o_ref).
        o_ref[...] = acc_ref[...].astype(o_ref.dtype)


def _pick_hidden_tile(hidden, k, elem_bytes, budget_bytes=4 << 20):
    """Largest hidden tile whose W1 slab fits a conservative VMEM budget
    (double-buffered by the pipeline; 2 * 4 MiB is safe on every chip, incl. v5e)."""
    for t in (hidden, 2048, 1024, 512, 256, 128):
        if t <= hidden and hidden % t == 0 and k * t * elem_bytes <= budget_bytes:
            return t
    return 128


def fused_dense(x_bf16, w1, b1, w2, b2, *, max_batch_tile=256):
    """x_bf16: (B, K) bf16; w1: (K, H) bf16; b1: (H,) f32; w2: (H, O) f32; b2: (O,) f32."""
    B, K = x_bf16.shape
    K2, H = w1.shape
    H2, O = w2.shape
    assert K == K2 and H == H2

    tn = _pick_hidden_tile(H, K, elem_bytes=w1.dtype.itemsize)   # = 1024 here -> 1 hidden step

    # --- batch tiling: bound VMEM / vreg pressure, enable megacore batch parallelism
    if B <= max_batch_tile:
        tb, Bp = B, B                       # single batch tile (full-dim block is legal)
        xp = x_bf16
    else:
        tb = max_batch_tile                 # multiple of 8
        Bp = pl.cdiv(B, tb) * tb
        xp = jnp.pad(x_bf16, ((0, Bp - B), (0, 0))) if Bp != B else x_bf16

    grid = (Bp // tb, H // tn)

    out = pl.pallas_call(
        _fused_mlp_kernel,
        out_shape=jax.ShapeDtypeStruct((Bp, O), jnp.float32),
        grid_spec=pltpu.PrefetchScalarGridSpec(
            num_scalar_prefetch=0,
            grid=grid,
            in_specs=[
                pl.BlockSpec((tb, K), lambda i, j: (i, 0)),    # x   batch tile (bf16)
                pl.BlockSpec((K, tn), lambda i, j: (0, j)),    # W1  hidden tile (bf16)
                pl.BlockSpec((1, tn), lambda i, j: (0, j)),    # b1  hidden tile (f32)
                pl.BlockSpec((tn, O), lambda i, j: (j, 0)),    # W2  hidden tile (f32)
                pl.BlockSpec((1, O), lambda i, j: (0, 0)),     # b2  resident (f32)
            ],
            out_specs=pl.BlockSpec((tb, O), lambda i, j: (i, 0)),
            scratch_shapes=[pltpu.VMEM((tb, O), jnp.float32)],  # f32 accumulator
        ),
        compiler_params=pltpu.CompilerParams(
            dimension_semantics=("parallel", "arbitrary"),   # batch parallel, hidden reduction
            vmem_limit_bytes=32 * 1024 * 1024,               # explicit, safe on v5e/v6e/v7x
        ),
    )(xp, w1, b1.reshape(1, H), w2, b2.reshape(1, O))

    return out[:B] if Bp != B else out


def dense_network_forward(X, params):
    """Pallas equivalent of Dense_Network.forward (including the .squeeze(1))."""
    lead = X.shape[:-1]
    # Cast x ONCE here (bf16 activation stream) rather than per grid step in-kernel.
    x2d = X.reshape(-1, X.shape[-1]).astype(jnp.bfloat16)
    y = fused_dense(x2d, params["W1"], params["b1"], params["W2"], params["b2"])
    y = y.reshape(*lead, OUT_DIM)
    if y.ndim > 1 and y.shape[1] == 1:      # torch's .squeeze(1) (no-op for 2-D X)
        y = jnp.squeeze(y, axis=1)
    return y


# --------------------------------------------------------------------------
# Pure-JAX f32 reference (sanity check only)
# --------------------------------------------------------------------------
def _ref_dense(X, w1, b1, w2, b2):
    h = X @ w1 + b1
    h = jnp.where(h >= 0, h, NEG_SLOPE * h)
    return h @ w2 + b2


# --------------------------------------------------------------------------
if __name__ == "__main__":
    B = 2
    root = jax.random.PRNGKey(0)
    k_w1, k_b1, k_w2, k_b2, k_x = jax.random.split(root, 5)

    # PyTorch Linear weights stored transposed as (fan_in, fan_out) so x @ W == x @ weight.T
    w1_f32 = jax.random.normal(k_w1, (IN_DIM, HIDDEN), jnp.float32) / jnp.sqrt(float(IN_DIM))
    b1 = 0.01 * jax.random.normal(k_b1, (HIDDEN,), jnp.float32)
    w2_f32 = jax.random.normal(k_w2, (HIDDEN, OUT_DIM), jnp.float32) / jnp.sqrt(float(HIDDEN))
    b2 = 0.01 * jax.random.normal(k_b2, (OUT_DIM,), jnp.float32)
    X = jax.random.normal(k_x, (B, IN_DIM), jnp.float32)       # (2, 768)

    params = {
        "W1": w1_f32.astype(jnp.bfloat16),   # bf16 weight streaming (dominant DMA)
        "b1": b1,
        "W2": w2_f32,                        # W2 kept f32 (8 KiB) for numerics
        "b2": b2,
    }

    y = dense_network_forward(X, params)
    jax.block_until_ready(y)
    assert y.shape == (B, OUT_DIM), y.shape

    y_ref = _ref_dense(X, w1_f32, b1, w2_f32, b2)
    max_err = float(jnp.max(jnp.abs(y - y_ref)))
    assert jnp.allclose(y, y_ref, atol=2e-2, rtol=2e-2), (
        "mismatch vs reference, max err = %f" % max_err)

    print("KERNEL_OK")
</pallas_src>

<mosaic_0001>
module attributes {stable_mosaic.version = 11 : i64} {
  func.func @_fused_mlp_kernel(%arg0: i32, %arg1: i32, %arg2: memref<2x768xbf16, #tpu.memory_space<vmem>>, %arg3: memref<768x1024xbf16, #tpu.memory_space<vmem>>, %arg4: memref<1x1024xf32, #tpu.memory_space<vmem>>, %arg5: memref<1024x2xf32, #tpu.memory_space<vmem>>, %arg6: memref<1x2xf32, #tpu.memory_space<vmem>>, %arg7: memref<2x2xf32, #tpu.memory_space<vmem>>, %arg8: memref<2x2xf32, #tpu.memory_space<vmem>>) attributes {dimension_semantics = [#tpu.dimension_semantics<parallel>, #tpu.dimension_semantics<arbitrary>], iteration_bounds = array<i64: 1, 1>, scalar_prefetch = 0 : i64, scratch_operands = 1 : i64, tpu.core_type = #tpu.core_type<tc>, window_params = [{transform_indices = @transform_0, window_bounds = array<i64: 2, 768>}, {transform_indices = @transform_1, window_bounds = array<i64: 768, 1024>}, {transform_indices = @transform_2, window_bounds = array<i64: 1, 1024>}, {transform_indices = @transform_3, window_bounds = array<i64: 1024, 2>}, {pipeline_mode = #tpu.pipeline_mode<synchronous>, transform_indices = @transform_4, window_bounds = array<i64: 1, 2>}, {transform_indices = @transform_5, window_bounds = array<i64: 2, 2>}]} {
    %c0_i32 = arith.constant 0 : i32
    %0 = arith.cmpi eq, %arg1, %c0_i32 : i32
    %1 = arith.extui %0 : i1 to i32
    %c0_i32_0 = arith.constant 0 : i32
    %2 = arith.cmpi ne, %1, %c0_i32_0 : i32
    scf.if %2 {
      %c0_17 = arith.constant 0 : index
      %c0_18 = arith.constant 0 : index
      %22 = vector.load %arg6[%c0_17, %c0_18] : memref<1x2xf32, #tpu.memory_space<vmem>>, vector<1x2xf32>
      %23 = vector.shape_cast %22 : vector<1x2xf32> to vector<1x2xf32>
      %24 = vector.broadcast %23 : vector<1x2xf32> to vector<2x2xf32>
      %c0_19 = arith.constant 0 : index
      %c0_20 = arith.constant 0 : index
      %25 = vector.load %arg8[%c0_19, %c0_20] : memref<2x2xf32, #tpu.memory_space<vmem>>, vector<2x2xf32>
      tpu.vector_store %arg8[%c0_19, %c0_20], %24 {strides = array<i32>} : memref<2x2xf32, #tpu.memory_space<vmem>>, vector<2x2xf32>,
    } else {
    }
    %c0 = arith.constant 0 : index
    %c0_1 = arith.constant 0 : index
    %3 = vector.load %arg2[%c0, %c0_1] : memref<2x768xbf16, #tpu.memory_space<vmem>>, vector<2x768xbf16>
    %c0_2 = arith.constant 0 : index
    %c0_3 = arith.constant 0 : index
    %4 = vector.load %arg3[%c0_2, %c0_3] : memref<768x1024xbf16, #tpu.memory_space<vmem>>, vector<768x1024xbf16>
    %cst = arith.constant dense<0.000000e+00> : vector<2x1024xf32>
    %5 = tpu.matmul %3, %4, %cst {dimension_numbers = #tpu.dot_dimension_numbers<[1], [0], [0], [1], [0, 0, 1, 1], [], []>} : vector<2x768xbf16>, vector<768x1024xbf16>, vector<2x1024xf32> -> vector<2x1024xf32>
    %c0_4 = arith.constant 0 : index
    %c0_5 = arith.constant 0 : index
    %6 = vector.load %arg4[%c0_4, %c0_5] : memref<1x1024xf32, #tpu.memory_space<vmem>>, vector<1x1024xf32>
    %7 = vector.broadcast %6 : vector<1x1024xf32> to vector<2x1024xf32>
    %8 = arith.addf %5, %7 : vector<2x1024xf32>
    %cst_6 = arith.constant 0.000000e+00 : f32
    %9 = vector.broadcast %cst_6 : f32 to vector<2x1024xf32>
    %10 = arith.cmpf oge, %8, %9 : vector<2x1024xf32>
    %cst_7 = arith.constant 0.00999999977 : f32
    %11 = vector.broadcast %cst_7 : f32 to vector<2x1024xf32>
    %12 = arith.mulf %11, %8 : vector<2x1024xf32>
    %13 = arith.select %10, %8, %12 : vector<2x1024xi1>, vector<2x1024xf32>
    %c0_8 = arith.constant 0 : index
    %c0_9 = arith.constant 0 : index
    %14 = vector.load %arg8[%c0_8, %c0_9] : memref<2x2xf32, #tpu.memory_space<vmem>>, vector<2x2xf32>
    %c0_10 = arith.constant 0 : index
    %c0_11 = arith.constant 0 : index
    %15 = vector.load %arg5[%c0_10, %c0_11] : memref<1024x2xf32, #tpu.memory_space<vmem>>, vector<1024x2xf32>
    %cst_12 = arith.constant dense<0.000000e+00> : vector<2x2xf32>
    %16 = tpu.matmul %13, %15, %cst_12 {dimension_numbers = #tpu.dot_dimension_numbers<[1], [0], [0], [1], [0, 0, 1, 1], [], []>} : vector<2x1024xf32>, vector<1024x2xf32>, vector<2x2xf32> -> vector<2x2xf32>
    %17 = arith.addf %14, %16 : vector<2x2xf32>
    %c0_13 = arith.constant 0 : index
    %c0_14 = arith.constant 0 : index
    %18 = vector.load %arg8[%c0_13, %c0_14] : memref<2x2xf32, #tpu.memory_space<vmem>>, vector<2x2xf32>
    tpu.vector_store %arg8[%c0_13, %c0_14], %17 {strides = array<i32>} : memref<2x2xf32, #tpu.memory_space<vmem>>, vector<2x2xf32>,
    %c0_i32_15 = arith.constant 0 : i32
    %19 = arith.cmpi eq, %arg1, %c0_i32_15 : i32
    %20 = arith.extui %19 : i1 to i32
    %c0_i32_16 = arith.constant 0 : i32
    %21 = arith.cmpi ne, %20, %c0_i32_16 : i32
    scf.if %21 {
      %c0_17 = arith.constant 0 : index
      %c0_18 = arith.constant 0 : index
      %22 = vector.load %arg8[%c0_17, %c0_18] : memref<2x2xf32, #tpu.memory_space<vmem>>, vector<2x2xf32>
      %c0_19 = arith.constant 0 : index
      %c0_20 = arith.constant 0 : index
      %23 = vector.load %arg7[%c0_19, %c0_20] : memref<2x2xf32, #tpu.memory_space<vmem>>, vector<2x2xf32>
      tpu.vector_store %arg7[%c0_19, %c0_20], %22 {strides = array<i32>} : memref<2x2xf32, #tpu.memory_space<vmem>>, vector<2x2xf32>,
    } else {
    }
    return
  }
  func.func @transform_0(%arg0: i32, %arg1: i32) -> (i32, i32) {
    %c0_i32 = arith.constant 0 : i32
    %c0_i32_0 = arith.constant 0 : i32
    return %arg0, %c0_i32 : i32, i32
  }
  func.func @transform_1(%arg0: i32, %arg1: i32) -> (i32, i32) {
    %c0_i32 = arith.constant 0 : i32
    %c0_i32_0 = arith.constant 0 : i32
    return %c0_i32, %arg1 : i32, i32
  }
  func.func @transform_2(%arg0: i32, %arg1: i32) -> (i32, i32) {
    %c0_i32 = arith.constant 0 : i32
    %c0_i32_0 = arith.constant 0 : i32
    return %c0_i32, %arg1 : i32, i32
  }
  func.func @transform_3(%arg0: i32, %arg1: i32) -> (i32, i32) {
    %c0_i32 = arith.constant 0 : i32
    %c0_i32_0 = arith.constant 0 : i32
    return %arg1, %c0_i32 : i32, i32
  }
  func.func @transform_4(%arg0: i32, %arg1: i32) -> (i32, i32) {
    %c0_i32 = arith.constant 0 : i32
    %c0_i32_0 = arith.constant 0 : i32
    %c0_i32_1 = arith.constant 0 : i32
    return %c0_i32, %c0_i32_0 : i32, i32
  }
  func.func @transform_5(%arg0: i32, %arg1: i32) -> (i32, i32) {
    %c0_i32 = arith.constant 0 : i32
    %c0_i32_0 = arith.constant 0 : i32
    return %arg0, %c0_i32 : i32, i32
  }
}

</mosaic_0001>

<llo_original>
// kernel: tpu_custom_call.1
$region0: #{tpu_custom_call.1}
  #allocation0 [shape = 'u32[]', space=smem, size = 0x4, offset = 0x4, fixed_abs, tag = 'smem constant byte address 0x4 - core index']
  #allocation1 [shape = 'u32[144,128]{1,0:T(1,128)}', space=vmem, size = 0x12000, scoped, tag = 'internal scratch']
  #allocation2 [shape = 'f32[2,2]{1,0:T(2,128)}', space=vmem, size = 0x400, scoped, tag = 'scratch operand']
  %s0 = inlined_call_operand.hbm [shape: bf16[2,768], index: 0, kind: input, shape index: {}]
  %s1 = inlined_call_operand.hbm [shape: bf16[768,1024], index: 1, kind: input, shape index: {}]
  %s2 = inlined_call_operand.hbm [shape: f32[1,1024], index: 2, kind: input, shape index: {}]
  %s3 = inlined_call_operand.vmem [shape: f32[1024,2], index: 3, kind: input, shape index: {}]
  %s4 = inlined_call_operand.hbm [shape: f32[1,2], index: 4, kind: input, shape index: {}]
  %s5 = inlined_call_operand.hbm [shape: f32[2,2], index: 5, kind: output, shape index: {}]
  %s6 = sld [smem:[#allocation0]]
  $region54: #{tpu_custom_call.1} parent=0
    _
  %s8 = ssub.s32 1, %s6
  %s9 = scalar_select 0, %s8, %s6
  $region1: #{tpu_custom_call.1} parent=0
    #allocation3 [shape = 'u8[3072]{0}', space=vmem, size = 0xc00, scoped, tag = 'input window, operand 0, single buffered']
    #allocation4 [shape = 's32[1]{0}', space=sflag, size = 0x4, scoped, tag = 'scoped memory for tpu_custom_call.1']
    #allocation5 [shape = 's32[1]{0}', space=sflag, size = 0x4, scoped, tag = 'scoped memory for tpu_custom_call.1']
    #allocation6 [shape = 'u8[1572864]{0}', space=vmem, size = 0x180000, scoped, tag = 'input window, operand 1, single buffered']
    #allocation7 [shape = 's32[1]{0}', space=sflag, size = 0x4, scoped, tag = 'scoped memory for tpu_custom_call.1']
    #allocation8 [shape = 'u8[4096]{0}', space=vmem, size = 0x1000, scoped, tag = 'input window, operand 2, single buffered']
    #allocation9 [shape = 'u8[512]{0}', space=vmem, size = 0x400, scoped, tag = 'input window, operand 4, single buffered']
    #allocation10 [shape = 's32[1]{0}', space=sflag, size = 0x4, scoped, tag = 'scoped memory for tpu_custom_call.1']
    #allocation11 [shape = 'u8[1024]{0}', space=vmem, size = 0x400, scoped, tag = 'output window, operand 0, single buffered']
    %10 = vsyncpa [#allocation4], 0
    %11 = vsyncpa [#allocation7], 0
    %12 = vsyncpa [#allocation10], 0
    %13 = vsyncpa [#allocation5], 0
    // Predicated region
    $region2: #{tpu_custom_call.1} parent=1 // pred_check
      _
    $region3: #{tpu_custom_call.1} parent=1 // pred_check_branch
      %15 = sbr.rel (0) target = $region5
    $region4: #{tpu_custom_call.1} parent=1 // pred_region
      %s17 = ssub.s32 96, 96
      %18 = vsyncadd [#allocation4], %s17
      %s20 = sshll.u32 [#allocation3], 4
      %s21 = int_to_ptr.vmem [resolvable:$true] %s20
      %23 = dma.hbm_to_vmem [thread:$0]  %s0, 96, %s21, [#allocation4]
    $region5: #{tpu_custom_call.1} parent=1 // pred_fallthru
      _
    // Predicated region
    $region6: #{tpu_custom_call.1} parent=1 // pred_check
      _
    $region7: #{tpu_custom_call.1} parent=1 // pred_check_branch
      %25 = sbr.rel (0) target = $region9
    $region8: #{tpu_custom_call.1} parent=1 // pred_region
      %s27 = ssub.s32 49152, 49152
      %28 = vsyncadd [#allocation7], %s27
      %s29 = sshll.u32 [#allocation6], 4
      %s30 = int_to_ptr.vmem [resolvable:$true] %s29
      %35 = dma.hbm_to_vmem [thread:$0]  %s1, 49152, %s30, [#allocation7], 512, 512, 32
    $region9: #{tpu_custom_call.1} parent=1 // pred_fallthru
      _
    // Predicated region
    $region10: #{tpu_custom_call.1} parent=1 // pred_check
      _
    $region11: #{tpu_custom_call.1} parent=1 // pred_check_branch
      %37 = sbr.rel (0) target = $region13
    $region12: #{tpu_custom_call.1} parent=1 // pred_region
      %s39 = ssub.s32 128, 128
      %40 = vsyncadd [#allocation7], %s39
      %s42 = sshll.u32 [#allocation8], 4
      %s43 = int_to_ptr.vmem [resolvable:$true] %s42
      %45 = dma.hbm_to_vmem [thread:$0]  %s2, 128, %s43, [#allocation7]
    $region13: #{tpu_custom_call.1} parent=1 // pred_fallthru
      _
    // Predicated region
    $region14: #{tpu_custom_call.1} parent=1 // pred_check
      _
    $region15: #{tpu_custom_call.1} parent=1 // pred_check_branch
      %47 = sbr.rel (0) target = $region17
    $region16: #{tpu_custom_call.1} parent=1 // pred_region
      _
    $region17: #{tpu_custom_call.1} parent=1 // pred_fallthru
      _
    // Predicated region
    $region18: #{tpu_custom_call.1} parent=1 // pred_check
      _
    $region19: #{tpu_custom_call.1} parent=1 // pred_check_branch
      %49 = sbr.rel (0) target = $region21
    $region20: #{tpu_custom_call.1} parent=1 // pred_region
      %s51 = ssub.s32 16, 16
      %52 = vsyncadd [#allocation10], %s51
      %s54 = sshll.u32 [#allocation9], 4
      %s55 = int_to_ptr.vmem [resolvable:$true] %s54
      %57 = dma.hbm_to_vmem [thread:$0]  %s4, 16, %s55, [#allocation10]
    $region21: #{tpu_custom_call.1} parent=1 // pred_fallthru
      _
    // Predicated region
    $region22: #{tpu_custom_call.1} parent=1 // pred_check
      _
    $region23: #{tpu_custom_call.1} parent=1 // pred_check_branch
      %59 = sbr.rel (0) target = $region25
    $region24: #{tpu_custom_call.1} parent=1 // pred_region
      %60 = dma.done [#allocation4], 96
    $region25: #{tpu_custom_call.1} parent=1 // pred_fallthru
      _
    // Predicated region
    $region26: #{tpu_custom_call.1} parent=1 // pred_check
      _
    $region27: #{tpu_custom_call.1} parent=1 // pred_check_branch
      %62 = sbr.rel (0) target = $region29
    $region28: #{tpu_custom_call.1} parent=1 // pred_region
      %63 = dma.done [#allocation7], 49152
    $region29: #{tpu_custom_call.1} parent=1 // pred_fallthru
      _
    // Predicated region
    $region30: #{tpu_custom_call.1} parent=1 // pred_check
      _
    $region31: #{tpu_custom_call.1} parent=1 // pred_check_branch
      %65 = sbr.rel (0) target = $region33
    $region32: #{tpu_custom_call.1} parent=1 // pred_region
      %66 = dma.done [#allocation7], 128
    $region33: #{tpu_custom_call.1} parent=1 // pred_fallthru
      _
    // Predicated region
    $region34: #{tpu_custom_call.1} parent=1 // pred_check
      _
    $region35: #{tpu_custom_call.1} parent=1 // pred_check_branch
      %68 = sbr.rel (0) target = $region37
    $region36: #{tpu_custom_call.1} parent=1 // pred_region
      %69 = dma.done [#allocation10], 16
    $region37: #{tpu_custom_call.1} parent=1 // pred_fallthru
      _
    %p70 = scmp.eq.s32.totalorder 0, 0
    // Predicated region
    $region38: #{tpu_custom_call.1} parent=1 // pred_check
      %p71 = pneg %p70
    $region39: #{tpu_custom_call.1} parent=1 // pred_check_branch
      %73 = sbr.rel (%p71) target = $region41
    $region40: #{tpu_custom_call.1} parent=1 // pred_region
      %v74 = vld [vmem:[#allocation9] sm:$0x1]
      %v76 = vlaneseq
      %v77 = vshrl.u32 %v76, 7
      %v78 = vsub.s32 0, %v77
      %v79 = vrot.slane %v74, %v78
      %vm81 = vcmask 9216
      %82 = vst.msk [vmem:[#allocation2] sm:$0x3] %vm81, %v79
    $region41: #{tpu_custom_call.1} parent=1 // pred_fallthru
      _
    %v83 = vld [vmem:[#allocation3] sm:$0x3f]
    %v84 = vld [vmem:[#allocation6] sm:$0xff]
    %v85 = vld [vmem:[#allocation6 + $0x8] sm:$0xff]
    %v86 = vld [vmem:[#allocation6 + $0x10] sm:$0xff]
    %v87 = vld [vmem:[#allocation6 + $0x18] sm:$0xff]
    %v88 = vld [vmem:[#allocation6 + $0x20] sm:$0xff]
    %v89 = vld [vmem:[#allocation6 + $0x28] sm:$0xff]
    %v90 = vld [vmem:[#allocation6 + $0x30] sm:$0xff]
    %v91 = vld [vmem:[#allocation6 + $0x38] sm:$0xff]
    %v92 = vld [vmem:[#allocation6 + $0x40] sm:$0xff]
    %v93 = vld [vmem:[#allocation6 + $0x48] sm:$0xff]
    %v94 = vld [vmem:[#allocation6 + $0x50] sm:$0xff]
    %v95 = vld [vmem:[#allocation6 + $0x58] sm:$0xff]
    %v96 = vld [vmem:[#allocation6 + $0x60] sm:$0xff]
    %v97 = vld [vmem:[#allocation6 + $0x68] sm:$0xff]
    %v98 = vld [vmem:[#allocation6 + $0x70] sm:$0xff]
    %v99 = vld [vmem:[#allocation6 + $0x78] sm:$0xff]
    %v100 = vld [vmem:[#allocation6 + $0x80] sm:$0xff]
    %v101 = vld [vmem:[#allocation6 + $0x88] sm:$0xff]
    %v102 = vld [vmem:[#allocation6 + $0x90] sm:$0xff]
    %v103 = vld [vmem:[#allocation6 + $0x98] sm:$0xff]
    %v104 = vld [vmem:[#allocation6 + $0xa0] sm:$0xff]
    %v105 = vld [vmem:[#allocation6 + $0xa8] sm:$0xff]
    %v106 = vld [vmem:[#allocation6 + $0xb0] sm:$0xff]
    %v107 = vld [vmem:[#allocation6 + $0xb8] sm:$0xff]
    %v108 = vld [vmem:[#allocation6 + $0xc0] sm:$0xff]
    %v109 = vld [vmem:[#allocation6 + $0xc8] sm:$0xff]
    %v110 = vld [vmem:[#allocation6 + $0xd0] sm:$0xff]
    %v111 = vld [vmem:[#allocation6 + $0xd8] sm:$0xff]
    %v112 = vld [vmem:[#allocation6 + $0xe0] sm:$0xff]
    %v113 = vld [vmem:[#allocation6 + $0xe8] sm:$0xff]
    %v114 = vld [vmem:[#allocation6 + $0xf0] sm:$0xff]
    %v115 = vld [vmem:[#allocation6 + $0xf8] sm:$0xff]
    %v116 = vld [vmem:[#allocation6 + $0x100] sm:$0xff]
    %v117 = vld [vmem:[#allocation6 + $0x108] sm:$0xff]
    %v118 = vld [vmem:[#allocation6 + $0x110] sm:$0xff]
    %v119 = vld [vmem:[#allocation6 + $0x118] sm:$0xff]
    %v120 = vld [vmem:[#allocation6 + $0x120] sm:$0xff]
    %v121 = vld [vmem:[#allocation6 + $0x128] sm:$0xff]
    %v122 = vld [vmem:[#allocation6 + $0x130] sm:$0xff]
    %v123 = vld [vmem:[#allocation6 + $0x138] sm:$0xff]
    %v124 = vld [vmem:[#allocation6 + $0x140] sm:$0xff]
    %v125 = vld [vmem:[#allocation6 + $0x148] sm:$0xff]
    %v126 = vld [vmem:[#allocation6 + $0x150] sm:$0xff]
    %v127 = vld [vmem:[#allocation6 + $0x158] sm:$0xff]
    %v128 = vld [vmem:[#allocation6 + $0x160] sm:$0xff]
    %v129 = vld [vmem:[#allocation6 + $0x168] sm:$0xff]
    %v130 = vld [vmem:[#allocation6 + $0x170] sm:$0xff]
    %v131 = vld [vmem:[#allocation6 + $0x178] sm:$0xff]
    %v132 = vld [vmem:[#allocation6 + $0x180] sm:$0xff]
    %v133 = vld [vmem:[#allocation6 + $0x188] sm:$0xff]
    %v134 = vld [vmem:[#allocation6 + $0x190] sm:$0xff]
    %v135 = vld [vmem:[#allocation6 + $0x198] sm:$0xff]
    %v136 = vld [vmem:[#allocation6 + $0x1a0] sm:$0xff]
    %v137 = vld [vmem:[#allocation6 + $0x1a8] sm:$0xff]
    %v138 = vld [vmem:[#allocation6 + $0x1b0] sm:$0xff]
    %v139 = vld [vmem:[#allocation6 + $0x1b8] sm:$0xff]
    %v140 = vld [vmem:[#allocation6 + $0x1c0] sm:$0xff]
    %v141 = vld [vmem:[#allocation6 + $0x1c8] sm:$0xff]
    %v142 = vld [vmem:[#allocation6 + $0x1d0] sm:$0xff]
    %v143 = vld [vmem:[#allocation6 + $0x1d8] sm:$0xff]
    %v144 = vld [vmem:[#allocation6 + $0x1e0] sm:$0xff]
    %v145 = vld [vmem:[#allocation6 + $0x1e8] sm:$0xff]
    %v146 = vld [vmem:[#allocation6 + $0x1f0] sm:$0xff]
    %v147 = vld [vmem:[#allocation6 + $0x1f8] sm:$0xff]
    %v148 = vld [vmem:[#allocation6 + $0x200] sm:$0xff]
    %v149 = vld [vmem:[#allocation6 + $0x208] sm:$0xff]
    %v150 = vld [vmem:[#allocation6 + $0x210] sm:$0xff]
    %v151 = vld [vmem:[#allocation6 + $0x218] sm:$0xff]
    %v152 = vld [vmem:[#allocation6 + $0x220] sm:$0xff]
    %v153 = vld [vmem:[#allocation6 + $0x228] sm:$0xff]
    %v154 = vld [vmem:[#allocation6 + $0x230] sm:$0xff]
    %v155 = vld [vmem:[#allocation6 + $0x238] sm:$0xff]
    %v156 = vld [vmem:[#allocation6 + $0x240] sm:$0xff]
    %v157 = vld [vmem:[#allocation6 + $0x248] sm:$0xff]
    %v158 = vld [vmem:[#allocation6 + $0x250] sm:$0xff]
    %v159 = vld [vmem:[#allocation6 + $0x258] sm:$0xff]
    %v160 = vld [vmem:[#allocation6 + $0x260] sm:$0xff]
    %v161 = vld [vmem:[#allocation6 + $0x268] sm:$0xff]
    %v162 = vld [vmem:[#allocation6 + $0x270] sm:$0xff]
    %v163 = vld [vmem:[#allocation6 + $0x278] sm:$0xff]
    %v164 = vld [vmem:[#allocation6 + $0x280] sm:$0xff]
    %v165 = vld [vmem:[#allocation6 + $0x288] sm:$0xff]
    %v166 = vld [vmem:[#allocation6 + $0x290] sm:$0xff]
    %v167 = vld [vmem:[#allocation6 + $0x298] sm:$0xff]
    %v168 = vld [vmem:[#allocation6 + $0x2a0] sm:$0xff]
    %v169 = vld [vmem:[#allocation6 + $0x2a8] sm:$0xff]
    %v170 = vld [vmem:[#allocation6 + $0x2b0] sm:$0xff]
    %v171 = vld [vmem:[#allocation6 + $0x2b8] sm:$0xff]
    %v172 = vld [vmem:[#allocation6 + $0x2c0] sm:$0xff]
    %v173 = vld [vmem:[#allocation6 + $0x2c8] sm:$0xff]
    %v174 = vld [vmem:[#allocation6 + $0x2d0] sm:$0xff]
    %v175 = vld [vmem:[#allocation6 + $0x2d8] sm:$0xff]
    %v176 = vld [vmem:[#allocation6 + $0x2e0] sm:$0xff]
    %v177 = vld [vmem:[#allocation6 + $0x2e8] sm:$0xff]
    %v178 = vld [vmem:[#allocation6 + $0x2f0] sm:$0xff]
    %v179 = vld [vmem:[#allocation6 + $0x2f8] sm:$0xff]
    %v180 = vld [vmem:[#allocation6 + $0x300] sm:$0xff]
    %v181 = vld [vmem:[#allocation6 + $0x308] sm:$0xff]
    %v182 = vld [vmem:[#allocation6 + $0x310] sm:$0xff]
    %v183 = vld [vmem:[#allocation6 + $0x318] sm:$0xff]
    %v184 = vld [vmem:[#allocation6 + $0x320] sm:$0xff]
    %v185 = vld [vmem:[#allocation6 + $0x328] sm:$0xff]
    %v186 = vld [vmem:[#allocation6 + $0x330] sm:$0xff]
    %v187 = vld [vmem:[#allocation6 + $0x338] sm:$0xff]
    %v188 = vld [vmem:[#allocation6 + $0x340] sm:$0xff]
    %v189 = vld [vmem:[#allocation6 + $0x348] sm:$0xff]
    %v190 = vld [vmem:[#allocation6 + $0x350] sm:$0xff]
    %v191 = vld [vmem:[#allocation6 + $0x358] sm:$0xff]
    %v192 = vld [vmem:[#allocation6 + $0x360] sm:$0xff]
    %v193 = vld [vmem:[#allocation6 + $0x368] sm:$0xff]
    %v194 = vld [vmem:[#allocation6 + $0x370] sm:$0xff]
    %v195 = vld [vmem:[#allocation6 + $0x378] sm:$0xff]
    %v196 = vld [vmem:[#allocation6 + $0x380] sm:$0xff]
    %v197 = vld [vmem:[#allocation6 + $0x388] sm:$0xff]
    %v198 = vld [vmem:[#allocation6 + $0x390] sm:$0xff]
    %v199 = vld [vmem:[#allocation6 + $0x398] sm:$0xff]
    %v200 = vld [vmem:[#allocation6 + $0x3a0] sm:$0xff]
    %v201 = vld [vmem:[#allocation6 + $0x3a8] sm:$0xff]
    %v202 = vld [vmem:[#allocation6 + $0x3b0] sm:$0xff]
    %v203 = vld [vmem:[#allocation6 + $0x3b8] sm:$0xff]
    %v204 = vld [vmem:[#allocation6 + $0x3c0] sm:$0xff]
    %v205 = vld [vmem:[#allocation6 + $0x3c8] sm:$0xff]
    %v206 = vld [vmem:[#allocation6 + $0x3d0] sm:$0xff]
    %v207 = vld [vmem:[#allocation6 + $0x3d8] sm:$0xff]
    %v208 = vld [vmem:[#allocation6 + $0x3e0] sm:$0xff]
    %v209 = vld [vmem:[#allocation6 + $0x3e8] sm:$0xff]
    %v210 = vld [vmem:[#allocation6 + $0x3f0] sm:$0xff]
    %v211 = vld [vmem:[#allocation6 + $0x3f8] sm:$0xff]
    %v212 = vld [vmem:[#allocation6 + $0x400] sm:$0xff]
    %v213 = vld [vmem:[#allocation6 + $0x408] sm:$0xff]
    %v214 = vld [vmem:[#allocation6 + $0x410] sm:$0xff]
    %v215 = vld [vmem:[#allocation6 + $0x418] sm:$0xff]
    %v216 = vld [vmem:[#allocation6 + $0x420] sm:$0xff]
    %v217 = vld [vmem:[#allocation6 + $0x428] sm:$0xff]
    %v218 = vld [vmem:[#allocation6 + $0x430] sm:$0xff]
    %v219 = vld [vmem:[#allocation6 + $0x438] sm:$0xff]
    %v220 = vld [vmem:[#allocation6 + $0x440] sm:$0xff]
    %v221 = vld [vmem:[#allocation6 + $0x448] sm:$0xff]
    %v222 = vld [vmem:[#allocation6 + $0x450] sm:$0xff]
    %v223 = vld [vmem:[#allocation6 + $0x458] sm:$0xff]
    %v224 = vld [vmem:[#allocation6 + $0x460] sm:$0xff]
    %v225 = vld [vmem:[#allocation6 + $0x468] sm:$0xff]
    %v226 = vld [vmem:[#allocation6 + $0x470] sm:$0xff]
    %v227 = vld [vmem:[#allocation6 + $0x478] sm:$0xff]
    %v228 = vld [vmem:[#allocation6 + $0x480] sm:$0xff]
    %v229 = vld [vmem:[#allocation6 + $0x488] sm:$0xff]
    %v230 = vld [vmem:[#allocation6 + $0x490] sm:$0xff]
    %v231 = vld [vmem:[#allocation6 + $0x498] sm:$0xff]
    %v232 = vld [vmem:[#allocation6 + $0x4a0] sm:$0xff]
    %v233 = vld [vmem:[#allocation6 + $0x4a8] sm:$0xff]
    %v234 = vld [vmem:[#allocation6 + $0x4b0] sm:$0xff]
    %v235 = vld [vmem:[#allocation6 + $0x4b8] sm:$0xff]
    %v236 = vld [vmem:[#allocation6 + $0x4c0] sm:$0xff]
    %v237 = vld [vmem:[#allocation6 + $0x4c8] sm:$0xff]
    %v238 = vld [vmem:[#allocation6 + $0x4d0] sm:$0xff]
    %v239 = vld [vmem:[#allocation6 + $0x4d8] sm:$0xff]
    %v240 = vld [vmem:[#allocation6 + $0x4e0] sm:$0xff]
    %v241 = vld [vmem:[#allocation6 + $0x4e8] sm:$0xff]
    %v242 = vld [vmem:[#allocation6 + $0x4f0] sm:$0xff]
    %v243 = vld [vmem:[#allocation6 + $0x4f8] sm:$0xff]
    %v244 = vld [vmem:[#allocation6 + $0x500] sm:$0xff]
    %v245 = vld [vmem:[#allocation6 + $0x508] sm:$0xff]
    %v246 = vld [vmem:[#allocation6 + $0x510] sm:$0xff]
    %v247 = vld [vmem:[#allocation6 + $0x518] sm:$0xff]
    %v248 = vld [vmem:[#allocation6 + $0x520] sm:$0xff]
    %v249 = vld [vmem:[#allocation6 + $0x528] sm:$0xff]
    %v250 = vld [vmem:[#allocation6 + $0x530] sm:$0xff]
    %v251 = vld [vmem:[#allocation6 + $0x538] sm:$0xff]
    %v252 = vld [vmem:[#allocation6 + $0x540] sm:$0xff]
    %v253 = vld [vmem:[#allocation6 + $0x548] sm:$0xff]
    %v254 = vld [vmem:[#allocation6 + $0x550] sm:$0xff]
    %v255 = vld [vmem:[#allocation6 + $0x558] sm:$0xff]
    %v256 = vld [vmem:[#allocation6 + $0x560] sm:$0xff]
    %v257 = vld [vmem:[#allocation6 + $0x568] sm:$0xff]
    %v258 = vld [vmem:[#allocation6 + $0x570] sm:$0xff]
    %v259 = vld [vmem:[#allocation6 + $0x578] sm:$0xff]
    %v260 = vld [vmem:[#allocation6 + $0x580] sm:$0xff]
    %v261 = vld [vmem:[#allocation6 + $0x588] sm:$0xff]
    %v262 = vld [vmem:[#allocation6 + $0x590] sm:$0xff]
    %v263 = vld [vmem:[#allocation6 + $0x598] sm:$0xff]
    %v264 = vld [vmem:[#allocation6 + $0x5a0] sm:$0xff]
    %v265 = vld [vmem:[#allocation6 + $0x5a8] sm:$0xff]
    %v266 = vld [vmem:[#allocation6 + $0x5b0] sm:$0xff]
    %v267 = vld [vmem:[#allocation6 + $0x5b8] sm:$0xff]
    %v268 = vld [vmem:[#allocation6 + $0x5c0] sm:$0xff]
    %v269 = vld [vmem:[#allocation6 + $0x5c8] sm:$0xff]
    %v270 = vld [vmem:[#allocation6 + $0x5d0] sm:$0xff]
    %v271 = vld [vmem:[#allocation6 + $0x5d8] sm:$0xff]
    %v272 = vld [vmem:[#allocation6 + $0x5e0] sm:$0xff]
    %v273 = vld [vmem:[#allocation6 + $0x5e8] sm:$0xff]
    %v274 = vld [vmem:[#allocation6 + $0x5f0] sm:$0xff]
    %v275 = vld [vmem:[#allocation6 + $0x5f8] sm:$0xff]
    %v276 = vld [vmem:[#allocation6 + $0x600] sm:$0xff]
    %v277 = vld [vmem:[#allocation6 + $0x608] sm:$0xff]
    %v278 = vld [vmem:[#allocation6 + $0x610] sm:$0xff]
    %v279 = vld [vmem:[#allocation6 + $0x618] sm:$0xff]
    %v280 = vld [vmem:[#allocation6 + $0x620] sm:$0xff]
    %v281 = vld [vmem:[#allocation6 + $0x628] sm:$0xff]
    %v282 = vld [vmem:[#allocation6 + $0x630] sm:$0xff]
    %v283 = vld [vmem:[#allocation6 + $0x638] sm:$0xff]
    %v284 = vld [vmem:[#allocation6 + $0x640] sm:$0xff]
    %v285 = vld [vmem:[#allocation6 + $0x648] sm:$0xff]
    %v286 = vld [vmem:[#allocation6 + $0x650] sm:$0xff]
    %v287 = vld [vmem:[#allocation6 + $0x658] sm:$0xff]
    %v288 = vld [vmem:[#allocation6 + $0x660] sm:$0xff]
    %v289 = vld [vmem:[#allocation6 + $0x668] sm:$0xff]
    %v290 = vld [vmem:[#allocation6 + $0x670] sm:$0xff]
    %v291 = vld [vmem:[#allocation6 + $0x678] sm:$0xff]
    %v292 = vld [vmem:[#allocation6 + $0x680] sm:$0xff]
    %v293 = vld [vmem:[#allocation6 + $0x688] sm:$0xff]
    %v294 = vld [vmem:[#allocation6 + $0x690] sm:$0xff]
    %v295 = vld [vmem:[#allocation6 + $0x698] sm:$0xff]
    %v296 = vld [vmem:[#allocation6 + $0x6a0] sm:$0xff]
    %v297 = vld [vmem:[#allocation6 + $0x6a8] sm:$0xff]
    %v298 = vld [vmem:[#allocation6 + $0x6b0] sm:$0xff]
    %v299 = vld [vmem:[#allocation6 + $0x6b8] sm:$0xff]
    %v300 = vld [vmem:[#allocation6 + $0x6c0] sm:$0xff]
    %v301 = vld [vmem:[#allocation6 + $0x6c8] sm:$0xff]
    %v302 = vld [vmem:[#allocation6 + $0x6d0] sm:$0xff]
    %v303 = vld [vmem:[#allocation6 + $0x6d8] sm:$0xff]
    %v304 = vld [vmem:[#allocation6 + $0x6e0] sm:$0xff]
    %v305 = vld [vmem:[#allocation6 + $0x6e8] sm:$0xff]
    %v306 = vld [vmem:[#allocation6 + $0x6f0] sm:$0xff]
    %v307 = vld [vmem:[#allocation6 + $0x6f8] sm:$0xff]
    %v308 = vld [vmem:[#allocation6 + $0x700] sm:$0xff]
    %v309 = vld [vmem:[#allocation6 + $0x708] sm:$0xff]
    %v310 = vld [vmem:[#allocation6 + $0x710] sm:$0xff]
    %v311 = vld [vmem:[#allocation6 + $0x718] sm:$0xff]
    %v312 = vld [vmem:[#allocation6 + $0x720] sm:$0xff]
    %v313 = vld [vmem:[#allocation6 + $0x728] sm:$0xff]
    %v314 = vld [vmem:[#allocation6 + $0x730] sm:$0xff]
    %v315 = vld [vmem:[#allocation6 + $0x738] sm:$0xff]
    %v316 = vld [vmem:[#allocation6 + $0x740] sm:$0xff]
    %v317 = vld [vmem:[#allocation6 + $0x748] sm:$0xff]
    %v318 = vld [vmem:[#allocation6 + $0x750] sm:$0xff]
    %v319 = vld [vmem:[#allocation6 + $0x758] sm:$0xff]
    %v320 = vld [vmem:[#allocation6 + $0x760] sm:$0xff]
    %v321 = vld [vmem:[#allocation6 + $0x768] sm:$0xff]
    %v322 = vld [vmem:[#allocation6 + $0x770] sm:$0xff]
    %v323 = vld [vmem:[#allocation6 + $0x778] sm:$0xff]
    %v324 = vld [vmem:[#allocation6 + $0x780] sm:$0xff]
    %v325 = vld [vmem:[#allocation6 + $0x788] sm:$0xff]
    %v326 = vld [vmem:[#allocation6 + $0x790] sm:$0xff]
    %v327 = vld [vmem:[#allocation6 + $0x798] sm:$0xff]
    %v328 = vld [vmem:[#allocation6 + $0x7a0] sm:$0xff]
    %v329 = vld [vmem:[#allocation6 + $0x7a8] sm:$0xff]
    %v330 = vld [vmem:[#allocation6 + $0x7b0] sm:$0xff]
    %v331 = vld [vmem:[#allocation6 + $0x7b8] sm:$0xff]
    %v332 = vld [vmem:[#allocation6 + $0x7c0] sm:$0xff]
    %v333 = vld [vmem:[#allocation6 + $0x7c8] sm:$0xff]
    %v334 = vld [vmem:[#allocation6 + $0x7d0] sm:$0xff]
    %v335 = vld [vmem:[#allocation6 + $0x7d8] sm:$0xff]
    %v336 = vld [vmem:[#allocation6 + $0x7e0] sm:$0xff]
    %v337 = vld [vmem:[#allocation6 + $0x7e8] sm:$0xff]
    %v338 = vld [vmem:[#allocation6 + $0x7f0] sm:$0xff]
    %v339 = vld [vmem:[#allocation6 + $0x7f8] sm:$0xff]
    %v340 = vld [vmem:[#allocation6 + $0x800] sm:$0xff]
    %v341 = vld [vmem:[#allocation6 + $0x808] sm:$0xff]
    %v342 = vld [vmem:[#allocation6 + $0x810] sm:$0xff]
    %v343 = vld [vmem:[#allocation6 + $0x818] sm:$0xff]
    %v344 = vld [vmem:[#allocation6 + $0x820] sm:$0xff]
    %v345 = vld [vmem:[#allocation6 + $0x828] sm:$0xff]
    %v346 = vld [vmem:[#allocation6 + $0x830] sm:$0xff]
    %v347 = vld [vmem:[#allocation6 + $0x838] sm:$0xff]
    %v348 = vld [vmem:[#allocation6 + $0x840] sm:$0xff]
    %v349 = vld [vmem:[#allocation6 + $0x848] sm:$0xff]
    %v350 = vld [vmem:[#allocation6 + $0x850] sm:$0xff]
    %v351 = vld [vmem:[#allocation6 + $0x858] sm:$0xff]
    %v352 = vld [vmem:[#allocation6 + $0x860] sm:$0xff]
    %v353 = vld [vmem:[#allocation6 + $0x868] sm:$0xff]
    %v354 = vld [vmem:[#allocation6 + $0x870] sm:$0xff]
    %v355 = vld [vmem:[#allocation6 + $0x878] sm:$0xff]
    %v356 = vld [vmem:[#allocation6 + $0x880] sm:$0xff]
    %v357 = vld [vmem:[#allocation6 + $0x888] sm:$0xff]
    %v358 = vld [vmem:[#allocation6 + $0x890] sm:$0xff]
    %v359 = vld [vmem:[#allocation6 + $0x898] sm:$0xff]
    %v360 = vld [vmem:[#allocation6 + $0x8a0] sm:$0xff]
    %v361 = vld [vmem:[#allocation6 + $0x8a8] sm:$0xff]
    %v362 = vld [vmem:[#allocation6 + $0x8b0] sm:$0xff]
    %v363 = vld [vmem:[#allocation6 + $0x8b8] sm:$0xff]
    %v364 = vld [vmem:[#allocation6 + $0x8c0] sm:$0xff]
    %v365 = vld [vmem:[#allocation6 + $0x8c8] sm:$0xff]
    %v366 = vld [vmem:[#allocation6 + $0x8d0] sm:$0xff]
    %v367 = vld [vmem:[#allocation6 + $0x8d8] sm:$0xff]
    %v368 = vld [vmem:[#allocation6 + $0x8e0] sm:$0xff]
    %v369 = vld [vmem:[#allocation6 + $0x8e8] sm:$0xff]
    %v370 = vld [vmem:[#allocation6 + $0x8f0] sm:$0xff]
    %v371 = vld [vmem:[#allocation6 + $0x8f8] sm:$0xff]
    %v372 = vld [vmem:[#allocation6 + $0x900] sm:$0xff]
    %v373 = vld [vmem:[#allocation6 + $0x908] sm:$0xff]
    %v374 = vld [vmem:[#allocation6 + $0x910] sm:$0xff]
    %v375 = vld [vmem:[#allocation6 + $0x918] sm:$0xff]
    %v376 = vld [vmem:[#allocation6 + $0x920] sm:$0xff]
    %v377 = vld [vmem:[#allocation6 + $0x928] sm:$0xff]
    %v378 = vld [vmem:[#allocation6 + $0x930] sm:$0xff]
    %v379 = vld [vmem:[#allocation6 + $0x938] sm:$0xff]
    %v380 = vld [vmem:[#allocation6 + $0x940] sm:$0xff]
    %v381 = vld [vmem:[#allocation6 + $0x948] sm:$0xff]
    %v382 = vld [vmem:[#allocation6 + $0x950] sm:$0xff]
    %v383 = vld [vmem:[#allocation6 + $0x958] sm:$0xff]
    %v384 = vld [vmem:[#allocation6 + $0x960] sm:$0xff]
    %v385 = vld [vmem:[#allocation6 + $0x968] sm:$0xff]
    %v386 = vld [vmem:[#allocation6 + $0x970] sm:$0xff]
    %v387 = vld [vmem:[#allocation6 + $0x978] sm:$0xff]
    %v388 = vld [vmem:[#allocation6 + $0x980] sm:$0xff]
    %v389 = vld [vmem:[#allocation6 + $0x988] sm:$0xff]
    %v390 = vld [vmem:[#allocation6 + $0x990] sm:$0xff]
    %v391 = vld [vmem:[#allocation6 + $0x998] sm:$0xff]
    %v392 = vld [vmem:[#allocation6 + $0x9a0] sm:$0xff]
    %v393 = vld [vmem:[#allocation6 + $0x9a8] sm:$0xff]
    %v394 = vld [vmem:[#allocation6 + $0x9b0] sm:$0xff]
    %v395 = vld [vmem:[#allocation6 + $0x9b8] sm:$0xff]
    %v396 = vld [vmem:[#allocation6 + $0x9c0] sm:$0xff]
    %v397 = vld [vmem:[#allocation6 + $0x9c8] sm:$0xff]
    %v398 = vld [vmem:[#allocation6 + $0x9d0] sm:$0xff]
    %v399 = vld [vmem:[#allocation6 + $0x9d8] sm:$0xff]
    %v400 = vld [vmem:[#allocation6 + $0x9e0] sm:$0xff]
    %v401 = vld [vmem:[#allocation6 + $0x9e8] sm:$0xff]
    %v402 = vld [vmem:[#allocation6 + $0x9f0] sm:$0xff]
    %v403 = vld [vmem:[#allocation6 + $0x9f8] sm:$0xff]
    %v404 = vld [vmem:[#allocation6 + $0xa00] sm:$0xff]
    %v405 = vld [vmem:[#allocation6 + $0xa08] sm:$0xff]
    %v406 = vld [vmem:[#allocation6 + $0xa10] sm:$0xff]
    %v407 = vld [vmem:[#allocation6 + $0xa18] sm:$0xff]
    %v408 = vld [vmem:[#allocation6 + $0xa20] sm:$0xff]
    %v409 = vld [vmem:[#allocation6 + $0xa28] sm:$0xff]
    %v410 = vld [vmem:[#allocation6 + $0xa30] sm:$0xff]
    %v411 = vld [vmem:[#allocation6 + $0xa38] sm:$0xff]
    %v412 = vld [vmem:[#allocation6 + $0xa40] sm:$0xff]
    %v413 = vld [vmem:[#allocation6 + $0xa48] sm:$0xff]
    %v414 = vld [vmem:[#allocation6 + $0xa50] sm:$0xff]
    %v415 = vld [vmem:[#allocation6 + $0xa58] sm:$0xff]
    %v416 = vld [vmem:[#allocation6 + $0xa60] sm:$0xff]
    %v417 = vld [vmem:[#allocation6 + $0xa68] sm:$0xff]
    %v418 = vld [vmem:[#allocation6 + $0xa70] sm:$0xff]
    %v419 = vld [vmem:[#allocation6 + $0xa78] sm:$0xff]
    %v420 = vld [vmem:[#allocation6 + $0xa80] sm:$0xff]
    %v421 = vld [vmem:[#allocation6 + $0xa88] sm:$0xff]
    %v422 = vld [vmem:[#allocation6 + $0xa90] sm:$0xff]
    %v423 = vld [vmem:[#allocation6 + $0xa98] sm:$0xff]
    %v424 = vld [vmem:[#allocation6 + $0xaa0] sm:$0xff]
    %v425 = vld [vmem:[#allocation6 + $0xaa8] sm:$0xff]
    %v426 = vld [vmem:[#allocation6 + $0xab0] sm:$0xff]
    %v427 = vld [vmem:[#allocation6 + $0xab8] sm:$0xff]
    %v428 = vld [vmem:[#allocation6 + $0xac0] sm:$0xff]
    %v429 = vld [vmem:[#allocation6 + $0xac8] sm:$0xff]
    %v430 = vld [vmem:[#allocation6 + $0xad0] sm:$0xff]
    %v431 = vld [vmem:[#allocation6 + $0xad8] sm:$0xff]
    %v432 = vld [vmem:[#allocation6 + $0xae0] sm:$0xff]
    %v433 = vld [vmem:[#allocation6 + $0xae8] sm:$0xff]
    %v434 = vld [vmem:[#allocation6 + $0xaf0] sm:$0xff]
    %v435 = vld [vmem:[#allocation6 + $0xaf8] sm:$0xff]
    %v436 = vld [vmem:[#allocation6 + $0xb00] sm:$0xff]
    %v437 = vld [vmem:[#allocation6 + $0xb08] sm:$0xff]
    %v438 = vld [vmem:[#allocation6 + $0xb10] sm:$0xff]
    %v439 = vld [vmem:[#allocation6 + $0xb18] sm:$0xff]
    %v440 = vld [vmem:[#allocation6 + $0xb20] sm:$0xff]
    %v441 = vld [vmem:[#allocation6 + $0xb28] sm:$0xff]
    %v442 = vld [vmem:[#allocation6 + $0xb30] sm:$0xff]
    %v443 = vld [vmem:[#allocation6 + $0xb38] sm:$0xff]
    %v444 = vld [vmem:[#allocation6 + $0xb40] sm:$0xff]
    %v445 = vld [vmem:[#allocation6 + $0xb48] sm:$0xff]
    %v446 = vld [vmem:[#allocation6 + $0xb50] sm:$0xff]
    %v447 = vld [vmem:[#allocation6 + $0xb58] sm:$0xff]
    %v448 = vld [vmem:[#allocation6 + $0xb60] sm:$0xff]
    %v449 = vld [vmem:[#allocation6 + $0xb68] sm:$0xff]
    %v450 = vld [vmem:[#allocation6 + $0xb70] sm:$0xff]
    %v451 = vld [vmem:[#allocation6 + $0xb78] sm:$0xff]
    %v452 = vld [vmem:[#allocation6 + $0xb80] sm:$0xff]
    %v453 = vld [vmem:[#allocation6 + $0xb88] sm:$0xff]
    %v454 = vld [vmem:[#allocation6 + $0xb90] sm:$0xff]
    %v455 = vld [vmem:[#allocation6 + $0xb98] sm:$0xff]
    %v456 = vld [vmem:[#allocation6 + $0xba0] sm:$0xff]
    %v457 = vld [vmem:[#allocation6 + $0xba8] sm:$0xff]
    %v458 = vld [vmem:[#allocation6 + $0xbb0] sm:$0xff]
    %v459 = vld [vmem:[#allocation6 + $0xbb8] sm:$0xff]
    %v460 = vld [vmem:[#allocation6 + $0xbc0] sm:$0xff]
    %v461 = vld [vmem:[#allocation6 + $0xbc8] sm:$0xff]
    %v462 = vld [vmem:[#allocation6 + $0xbd0] sm:$0xff]
    %v463 = vld [vmem:[#allocation6 + $0xbd8] sm:$0xff]
    %v464 = vld [vmem:[#allocation6 + $0xbe0] sm:$0xff]
    %v465 = vld [vmem:[#allocation6 + $0xbe8] sm:$0xff]
    %v466 = vld [vmem:[#allocation6 + $0xbf0] sm:$0xff]
    %v467 = vld [vmem:[#allocation6 + $0xbf8] sm:$0xff]
    %v468 = vld [vmem:[#allocation8] sm:$0xff]
    %v470 = vlaneseq
    %v471 = vshrl.u32 %v470, 7
    %v472 = vsub.s32 0, %v471
    %v473 = vrot.slane %v468, %v472
    %v474 = vlaneseq
    %v475 = vshrl.u32 %v474, 7
    %v476 = vsub.s32 1, %v475
    %v477 = vrot.slane %v468, %v476
    %v478 = vlaneseq
    %v479 = vshrl.u32 %v478, 7
    %v480 = vsub.s32 2, %v479
    %v481 = vrot.slane %v468, %v480
    %v482 = vlaneseq
    %v483 = vshrl.u32 %v482, 7
    %v484 = vsub.s32 3, %v483
    %v485 = vrot.slane %v468, %v484
    %v486 = vlaneseq
    %v487 = vshrl.u32 %v486, 7
    %v488 = vsub.s32 4, %v487
    %v489 = vrot.slane %v468, %v488
    %v490 = vlaneseq
    %v491 = vshrl.u32 %v490, 7
    %v492 = vsub.s32 5, %v491
    %v493 = vrot.slane %v468, %v492
    %v494 = vlaneseq
    %v495 = vshrl.u32 %v494, 7
    %v496 = vsub.s32 6, %v495
    %v497 = vrot.slane %v468, %v496
    %v498 = vlaneseq
    %v499 = vshrl.u32 %v498, 7
    %v500 = vsub.s32 7, %v499
    %v501 = vrot.slane %v468, %v500
    %v511 = vcombine.high %v83, %v83
    %v513 = vunpack.c.l.s4 1966171168
    %v514 = vunpack.c.0.s8 %v513
    %v515 = vlaneseq
    %v516 = vshrl.u32 %v515, 7
    %v517 = vsub.s32 %v514, %v516
    %v518 = vrot.slane %v83, %v517
    %v520 = vunpack.c.l.s4 1966171168
    %v521 = vunpack.c.0.s8 %v520
    %v522 = vlaneseq
    %v523 = vshrl.u32 %v522, 7
    %v524 = vsub.s32 %v521, %v523
    %v525 = vrot.slane %v511, %v524
    %v526 = vcombine.high %v518, %v518
    %v527 = vcombine.high %v525, %v525
    %v529 = vunpack.c.l.s4 1966171168
    %v530 = vunpack.c.0.s8 %v529
    %v531 = vlaneseq
    %v532 = vshrl.u32 %v531, 7
    %v533 = vsub.s32 %v530, %v532
    %v534 = vrot.slane %v518, %v533
    %v536 = vunpack.c.l.s4 1966171168
    %v537 = vunpack.c.0.s8 %v536
    %v538 = vlaneseq
    %v539 = vshrl.u32 %v538, 7
    %v540 = vsub.s32 %v537, %v539
    %v541 = vrot.slane %v525, %v540
    %v543 = vunpack.c.l.s4 1966171168
    %v544 = vunpack.c.0.s8 %v543
    %v545 = vlaneseq
    %v546 = vshrl.u32 %v545, 7
    %v547 = vsub.s32 %v544, %v546
    %v548 = vrot.slane %v526, %v547
    %v550 = vunpack.c.l.s4 1966171168
    %v551 = vunpack.c.0.s8 %v550
    %v552 = vlaneseq
    %v553 = vshrl.u32 %v552, 7
    %v554 = vsub.s32 %v551, %v553
    %v555 = vrot.slane %v527, %v554
    %v556 = vcombine.high %v534, %v534
    %v557 = vcombine.high %v548, %v548
    %v948 = vunpack.c.l.b16 %v84
    %v949 = vunpack.c.h.b16 %v84
    %v950 = vunpack.c.l.b16 %v85
    %v951 = vunpack.c.h.b16 %v85
    %v952 = vunpack.c.l.b16 %v86
    %v953 = vunpack.c.h.b16 %v86
    %v954 = vunpack.c.l.b16 %v87
    %v955 = vunpack.c.h.b16 %v87
    %v956 = vunpack.c.l.b16 %v88
    %v957 = vunpack.c.h.b16 %v88
    %v958 = vunpack.c.l.b16 %v89
    %v959 = vunpack.c.h.b16 %v89
    %v960 = vunpack.c.l.b16 %v90
    %v961 = vunpack.c.h.b16 %v90
    %v962 = vunpack.c.l.b16 %v91
    %v963 = vunpack.c.h.b16 %v91
    %v964 = vunpack.c.l.b16 %v92
    %v965 = vunpack.c.h.b16 %v92
    %v966 = vunpack.c.l.b16 %v93
    %v967 = vunpack.c.h.b16 %v93
    %v968 = vunpack.c.l.b16 %v94
    %v969 = vunpack.c.h.b16 %v94
    %v970 = vunpack.c.l.b16 %v95
    %v971 = vunpack.c.h.b16 %v95
    %v972 = vunpack.c.l.b16 %v96
    %v973 = vunpack.c.h.b16 %v96
    %v974 = vunpack.c.l.b16 %v97
    %v975 = vunpack.c.h.b16 %v97
    %v976 = vunpack.c.l.b16 %v98
    %v977 = vunpack.c.h.b16 %v98
    %v978 = vunpack.c.l.b16 %v99
    %v979 = vunpack.c.h.b16 %v99
    %v980 = vunpack.c.l.b16 %v100
    %v981 = vunpack.c.h.b16 %v100
    %v982 = vunpack.c.l.b16 %v101
    %v983 = vunpack.c.h.b16 %v101
    %v984 = vunpack.c.l.b16 %v102
    %v985 = vunpack.c.h.b16 %v102
    %v986 = vunpack.c.l.b16 %v103
    %v987 = vunpack.c.h.b16 %v103
    %v988 = vunpack.c.l.b16 %v104
    %v989 = vunpack.c.h.b16 %v104
    %v990 = vunpack.c.l.b16 %v105
    %v991 = vunpack.c.h.b16 %v105
    %v992 = vunpack.c.l.b16 %v106
    %v993 = vunpack.c.h.b16 %v106
    %v994 = vunpack.c.l.b16 %v107
    %v995 = vunpack.c.h.b16 %v107
    %v996 = vunpack.c.l.b16 %v108
    %v997 = vunpack.c.h.b16 %v108
    %v998 = vunpack.c.l.b16 %v109
    %v999 = vunpack.c.h.b16 %v109
    %v1000 = vunpack.c.l.b16 %v110
    %v1001 = vunpack.c.h.b16 %v110
    %v1002 = vunpack.c.l.b16 %v111
    %v1003 = vunpack.c.h.b16 %v111
    %v1004 = vunpack.c.l.b16 %v112
    %v1005 = vunpack.c.h.b16 %v112
    %v1006 = vunpack.c.l.b16 %v113
    %v1007 = vunpack.c.h.b16 %v113
    %v1008 = vunpack.c.l.b16 %v114
    %v1009 = vunpack.c.h.b16 %v114
    %v1010 = vunpack.c.l.b16 %v115
    %v1011 = vunpack.c.h.b16 %v115
    %v1012 = vunpack.c.l.b16 %v116
    %v1013 = vunpack.c.h.b16 %v116
    %v1014 = vunpack.c.l.b16 %v117
    %v1015 = vunpack.c.h.b16 %v117
    %v1016 = vunpack.c.l.b16 %v118
    %v1017 = vunpack.c.h.b16 %v118
    %v1018 = vunpack.c.l.b16 %v119
    %v1019 = vunpack.c.h.b16 %v119
    %v1020 = vunpack.c.l.b16 %v120
    %v1021 = vunpack.c.h.b16 %v120
    %v1022 = vunpack.c.l.b16 %v121
    %v1023 = vunpack.c.h.b16 %v121
    %v1024 = vunpack.c.l.b16 %v122
    %v1025 = vunpack.c.h.b16 %v122
    %v1026 = vunpack.c.l.b16 %v123
    %v1027 = vunpack.c.h.b16 %v123
    %v1028 = vunpack.c.l.b16 %v124
    %v1029 = vunpack.c.h.b16 %v124
    %v1030 = vunpack.c.l.b16 %v125
    %v1031 = vunpack.c.h.b16 %v125
    %v1032 = vunpack.c.l.b16 %v126
    %v1033 = vunpack.c.h.b16 %v126
    %v1034 = vunpack.c.l.b16 %v127
    %v1035 = vunpack.c.h.b16 %v127
    %v1036 = vunpack.c.l.b16 %v128
    %v1037 = vunpack.c.h.b16 %v128
    %v1038 = vunpack.c.l.b16 %v129
    %v1039 = vunpack.c.h.b16 %v129
    %v1040 = vunpack.c.l.b16 %v130
    %v1041 = vunpack.c.h.b16 %v130
    %v1042 = vunpack.c.l.b16 %v131
    %v1043 = vunpack.c.h.b16 %v131
    %v1044 = vunpack.c.l.b16 %v132
    %v1045 = vunpack.c.h.b16 %v132
    %v1046 = vunpack.c.l.b16 %v133
    %v1047 = vunpack.c.h.b16 %v133
    %v1048 = vunpack.c.l.b16 %v134
    %v1049 = vunpack.c.h.b16 %v134
    %v1050 = vunpack.c.l.b16 %v135
    %v1051 = vunpack.c.h.b16 %v135
    %v1052 = vunpack.c.l.b16 %v136
    %v1053 = vunpack.c.h.b16 %v136
    %v1054 = vunpack.c.l.b16 %v137
    %v1055 = vunpack.c.h.b16 %v137
    %v1056 = vunpack.c.l.b16 %v138
    %v1057 = vunpack.c.h.b16 %v138
    %v1058 = vunpack.c.l.b16 %v139
    %v1059 = vunpack.c.h.b16 %v139
    %v1060 = vunpack.c.l.b16 %v140
    %v1061 = vunpack.c.h.b16 %v140
    %v1062 = vunpack.c.l.b16 %v141
    %v1063 = vunpack.c.h.b16 %v141
    %v1064 = vunpack.c.l.b16 %v142
    %v1065 = vunpack.c.h.b16 %v142
    %v1066 = vunpack.c.l.b16 %v143
    %v1067 = vunpack.c.h.b16 %v143
    %v1068 = vunpack.c.l.b16 %v144
    %v1069 = vunpack.c.h.b16 %v144
    %v1070 = vunpack.c.l.b16 %v145
    %v1071 = vunpack.c.h.b16 %v145
    %v1072 = vunpack.c.l.b16 %v146
    %v1073 = vunpack.c.h.b16 %v146
    %v1074 = vunpack.c.l.b16 %v147
    %v1075 = vunpack.c.h.b16 %v147
    %v1076 = vunpack.c.l.b16 %v148
    %v1077 = vunpack.c.h.b16 %v148
    %v1078 = vunpack.c.l.b16 %v149
    %v1079 = vunpack.c.h.b16 %v149
    %v1080 = vunpack.c.l.b16 %v150
    %v1081 = vunpack.c.h.b16 %v150
    %v1082 = vunpack.c.l.b16 %v151
    %v1083 = vunpack.c.h.b16 %v151
    %v1084 = vunpack.c.l.b16 %v152
    %v1085 = vunpack.c.h.b16 %v152
    %v1086 = vunpack.c.l.b16 %v153
    %v1087 = vunpack.c.h.b16 %v153
    %v1088 = vunpack.c.l.b16 %v154
    %v1089 = vunpack.c.h.b16 %v154
    %v1090 = vunpack.c.l.b16 %v155
    %v1091 = vunpack.c.h.b16 %v155
    %v1092 = vunpack.c.l.b16 %v156
    %v1093 = vunpack.c.h.b16 %v156
    %v1094 = vunpack.c.l.b16 %v157
    %v1095 = vunpack.c.h.b16 %v157
    %v1096 = vunpack.c.l.b16 %v158
    %v1097 = vunpack.c.h.b16 %v158
    %v1098 = vunpack.c.l.b16 %v159
    %v1099 = vunpack.c.h.b16 %v159
    %v1100 = vunpack.c.l.b16 %v160
    %v1101 = vunpack.c.h.b16 %v160
    %v1102 = vunpack.c.l.b16 %v161
    %v1103 = vunpack.c.h.b16 %v161
    %v1104 = vunpack.c.l.b16 %v162
    %v1105 = vunpack.c.h.b16 %v162
    %v1106 = vunpack.c.l.b16 %v163
    %v1107 = vunpack.c.h.b16 %v163
    %v1108 = vunpack.c.l.b16 %v164
    %v1109 = vunpack.c.h.b16 %v164
    %v1110 = vunpack.c.l.b16 %v165
    %v1111 = vunpack.c.h.b16 %v165
    %v1112 = vunpack.c.l.b16 %v166
    %v1113 = vunpack.c.h.b16 %v166
    %v1114 = vunpack.c.l.b16 %v167
    %v1115 = vunpack.c.h.b16 %v167
    %v1116 = vunpack.c.l.b16 %v168
    %v1117 = vunpack.c.h.b16 %v168
    %v1118 = vunpack.c.l.b16 %v169
    %v1119 = vunpack.c.h.b16 %v169
    %v1120 = vunpack.c.l.b16 %v170
    %v1121 = vunpack.c.h.b16 %v170
    %v1122 = vunpack.c.l.b16 %v171
    %v1123 = vunpack.c.h.b16 %v171
    %v1124 = vunpack.c.l.b16 %v172
    %v1125 = vunpack.c.h.b16 %v172
    %v1126 = vunpack.c.l.b16 %v173
    %v1127 = vunpack.c.h.b16 %v173
    %v1128 = vunpack.c.l.b16 %v174
    %v1129 = vunpack.c.h.b16 %v174
    %v1130 = vunpack.c.l.b16 %v175
    %v1131 = vunpack.c.h.b16 %v175
    %v1132 = vunpack.c.l.b16 %v176
    %v1133 = vunpack.c.h.b16 %v176
    %v1134 = vunpack.c.l.b16 %v177
    %v1135 = vunpack.c.h.b16 %v177
    %v1136 = vunpack.c.l.b16 %v178
    %v1137 = vunpack.c.h.b16 %v178
    %v1138 = vunpack.c.l.b16 %v179
    %v1139 = vunpack.c.h.b16 %v179
    %v1140 = vunpack.c.l.b16 %v180
    %v1141 = vunpack.c.h.b16 %v180
    %v1142 = vunpack.c.l.b16 %v181
    %v1143 = vunpack.c.h.b16 %v181
    %v1144 = vunpack.c.l.b16 %v182
    %v1145 = vunpack.c.h.b16 %v182
    %v1146 = vunpack.c.l.b16 %v183
    %v1147 = vunpack.c.h.b16 %v183
    %v1148 = vunpack.c.l.b16 %v184
    %v1149 = vunpack.c.h.b16 %v184
    %v1150 = vunpack.c.l.b16 %v185
    %v1151 = vunpack.c.h.b16 %v185
    %v1152 = vunpack.c.l.b16 %v186
    %v1153 = vunpack.c.h.b16 %v186
    %v1154 = vunpack.c.l.b16 %v187
    %v1155 = vunpack.c.h.b16 %v187
    %v1156 = vunpack.c.l.b16 %v188
    %v1157 = vunpack.c.h.b16 %v188
    %v1158 = vunpack.c.l.b16 %v189
    %v1159 = vunpack.c.h.b16 %v189
    %v1160 = vunpack.c.l.b16 %v190
    %v1161 = vunpack.c.h.b16 %v190
    %v1162 = vunpack.c.l.b16 %v191
    %v1163 = vunpack.c.h.b16 %v191
    %v1164 = vunpack.c.l.b16 %v192
    %v1165 = vunpack.c.h.b16 %v192
    %v1166 = vunpack.c.l.b16 %v193
    %v1167 = vunpack.c.h.b16 %v193
    %v1168 = vunpack.c.l.b16 %v194
    %v1169 = vunpack.c.h.b16 %v194
    %v1170 = vunpack.c.l.b16 %v195
    %v1171 = vunpack.c.h.b16 %v195
    %v1172 = vunpack.c.l.b16 %v196
    %v1173 = vunpack.c.h.b16 %v196
    %v1174 = vunpack.c.l.b16 %v197
    %v1175 = vunpack.c.h.b16 %v197
    %v1176 = vunpack.c.l.b16 %v198
    %v1177 = vunpack.c.h.b16 %v198
    %v1178 = vunpack.c.l.b16 %v199
    %v1179 = vunpack.c.h.b16 %v199
    %v1180 = vunpack.c.l.b16 %v200
    %v1181 = vunpack.c.h.b16 %v200
    %v1182 = vunpack.c.l.b16 %v201
    %v1183 = vunpack.c.h.b16 %v201
    %v1184 = vunpack.c.l.b16 %v202
    %v1185 = vunpack.c.h.b16 %v202
    %v1186 = vunpack.c.l.b16 %v203
    %v1187 = vunpack.c.h.b16 %v203
    %v1188 = vunpack.c.l.b16 %v204
    %v1189 = vunpack.c.h.b16 %v204
    %v1190 = vunpack.c.l.b16 %v205
    %v1191 = vunpack.c.h.b16 %v205
    %v1192 = vunpack.c.l.b16 %v206
    %v1193 = vunpack.c.h.b16 %v206
    %v1194 = vunpack.c.l.b16 %v207
    %v1195 = vunpack.c.h.b16 %v207
    %v1196 = vunpack.c.l.b16 %v208
    %v1197 = vunpack.c.h.b16 %v208
    %v1198 = vunpack.c.l.b16 %v209
    %v1199 = vunpack.c.h.b16 %v209
    %v1200 = vunpack.c.l.b16 %v210
    %v1201 = vunpack.c.h.b16 %v210
    %v1202 = vunpack.c.l.b16 %v211
    %v1203 = vunpack.c.h.b16 %v211
    %v1204 = vunpack.c.l.b16 %v212
    %v1205 = vunpack.c.h.b16 %v212
    %v1206 = vunpack.c.l.b16 %v213
    %v1207 = vunpack.c.h.b16 %v213
    %v1208 = vunpack.c.l.b16 %v214
    %v1209 = vunpack.c.h.b16 %v214
    %v1210 = vunpack.c.l.b16 %v215
    %v1211 = vunpack.c.h.b16 %v215
    %v1212 = vunpack.c.l.b16 %v216
    %v1213 = vunpack.c.h.b16 %v216
    %v1214 = vunpack.c.l.b16 %v217
    %v1215 = vunpack.c.h.b16 %v217
    %v1216 = vunpack.c.l.b16 %v218
    %v1217 = vunpack.c.h.b16 %v218
    %v1218 = vunpack.c.l.b16 %v219
    %v1219 = vunpack.c.h.b16 %v219
    %v1220 = vunpack.c.l.b16 %v220
    %v1221 = vunpack.c.h.b16 %v220
    %v1222 = vunpack.c.l.b16 %v221
    %v1223 = vunpack.c.h.b16 %v221
    %v1224 = vunpack.c.l.b16 %v222
    %v1225 = vunpack.c.h.b16 %v222
    %v1226 = vunpack.c.l.b16 %v223
    %v1227 = vunpack.c.h.b16 %v223
    %v1228 = vunpack.c.l.b16 %v224
    %v1229 = vunpack.c.h.b16 %v224
    %v1230 = vunpack.c.l.b16 %v225
    %v1231 = vunpack.c.h.b16 %v225
    %v1232 = vunpack.c.l.b16 %v226
    %v1233 = vunpack.c.h.b16 %v226
    %v1234 = vunpack.c.l.b16 %v227
    %v1235 = vunpack.c.h.b16 %v227
    %v1236 = vunpack.c.l.b16 %v228
    %v1237 = vunpack.c.h.b16 %v228
    %v1238 = vunpack.c.l.b16 %v229
    %v1239 = vunpack.c.h.b16 %v229
    %v1240 = vunpack.c.l.b16 %v230
    %v1241 = vunpack.c.h.b16 %v230
    %v1242 = vunpack.c.l.b16 %v231
    %v1243 = vunpack.c.h.b16 %v231
    %v1244 = vunpack.c.l.b16 %v232
    %v1245 = vunpack.c.h.b16 %v232
    %v1246 = vunpack.c.l.b16 %v233
    %v1247 = vunpack.c.h.b16 %v233
    %v1248 = vunpack.c.l.b16 %v234
    %v1249 = vunpack.c.h.b16 %v234
    %v1250 = vunpack.c.l.b16 %v235
    %v1251 = vunpack.c.h.b16 %v235
    %v1252 = vunpack.c.l.b16 %v236
    %v1253 = vunpack.c.h.b16 %v236
    %v1254 = vunpack.c.l.b16 %v237
    %v1255 = vunpack.c.h.b16 %v237
    %v1256 = vunpack.c.l.b16 %v238
    %v1257 = vunpack.c.h.b16 %v238
    %v1258 = vunpack.c.l.b16 %v239
    %v1259 = vunpack.c.h.b16 %v239
    %v1260 = vunpack.c.l.b16 %v240
    %v1261 = vunpack.c.h.b16 %v240
    %v1262 = vunpack.c.l.b16 %v241
    %v1263 = vunpack.c.h.b16 %v241
    %v1264 = vunpack.c.l.b16 %v242
    %v1265 = vunpack.c.h.b16 %v242
    %v1266 = vunpack.c.l.b16 %v243
    %v1267 = vunpack.c.h.b16 %v243
    %v1268 = vunpack.c.l.b16 %v244
    %v1269 = vunpack.c.h.b16 %v244
    %v1270 = vunpack.c.l.b16 %v245
    %v1271 = vunpack.c.h.b16 %v245
    %v1272 = vunpack.c.l.b16 %v246
    %v1273 = vunpack.c.h.b16 %v246
    %v1274 = vunpack.c.l.b16 %v247
    %v1275 = vunpack.c.h.b16 %v247
    %v1276 = vunpack.c.l.b16 %v248
    %v1277 = vunpack.c.h.b16 %v248
    %v1278 = vunpack.c.l.b16 %v249
    %v1279 = vunpack.c.h.b16 %v249
    %v1280 = vunpack.c.l.b16 %v250
    %v1281 = vunpack.c.h.b16 %v250
    %v1282 = vunpack.c.l.b16 %v251
    %v1283 = vunpack.c.h.b16 %v251
    %v1284 = vunpack.c.l.b16 %v252
    %v1285 = vunpack.c.h.b16 %v252
    %v1286 = vunpack.c.l.b16 %v253
    %v1287 = vunpack.c.h.b16 %v253
    %v1288 = vunpack.c.l.b16 %v254
    %v1289 = vunpack.c.h.b16 %v254
    %v1290 = vunpack.c.l.b16 %v255
    %v1291 = vunpack.c.h.b16 %v255
    %v1292 = vunpack.c.l.b16 %v256
    %v1293 = vunpack.c.h.b16 %v256
    %v1294 = vunpack.c.l.b16 %v257
    %v1295 = vunpack.c.h.b16 %v257
    %v1296 = vunpack.c.l.b16 %v258
    %v1297 = vunpack.c.h.b16 %v258
    %v1298 = vunpack.c.l.b16 %v259
    %v1299 = vunpack.c.h.b16 %v259
    %v1300 = vunpack.c.l.b16 %v260
    %v1301 = vunpack.c.h.b16 %v260
    %v1302 = vunpack.c.l.b16 %v261
    %v1303 = vunpack.c.h.b16 %v261
    %v1304 = vunpack.c.l.b16 %v262
    %v1305 = vunpack.c.h.b16 %v262
    %v1306 = vunpack.c.l.b16 %v263
    %v1307 = vunpack.c.h.b16 %v263
    %v1308 = vunpack.c.l.b16 %v264
    %v1309 = vunpack.c.h.b16 %v264
    %v1310 = vunpack.c.l.b16 %v265
    %v1311 = vunpack.c.h.b16 %v265
    %v1312 = vunpack.c.l.b16 %v266
    %v1313 = vunpack.c.h.b16 %v266
    %v1314 = vunpack.c.l.b16 %v267
    %v1315 = vunpack.c.h.b16 %v267
    %v1316 = vunpack.c.l.b16 %v268
    %v1317 = vunpack.c.h.b16 %v268
    %v1318 = vunpack.c.l.b16 %v269
    %v1319 = vunpack.c.h.b16 %v269
    %v1320 = vunpack.c.l.b16 %v270
    %v1321 = vunpack.c.h.b16 %v270
    %v1322 = vunpack.c.l.b16 %v271
    %v1323 = vunpack.c.h.b16 %v271
    %v1324 = vunpack.c.l.b16 %v272
    %v1325 = vunpack.c.h.b16 %v272
    %v1326 = vunpack.c.l.b16 %v273
    %v1327 = vunpack.c.h.b16 %v273
    %v1328 = vunpack.c.l.b16 %v274
    %v1329 = vunpack.c.h.b16 %v274
    %v1330 = vunpack.c.l.b16 %v275
    %v1331 = vunpack.c.h.b16 %v275
    %v1332 = vunpack.c.l.b16 %v276
    %v1333 = vunpack.c.h.b16 %v276
    %v1334 = vunpack.c.l.b16 %v277
    %v1335 = vunpack.c.h.b16 %v277
    %v1336 = vunpack.c.l.b16 %v278
    %v1337 = vunpack.c.h.b16 %v278
    %v1338 = vunpack.c.l.b16 %v279
    %v1339 = vunpack.c.h.b16 %v279
    %v1340 = vunpack.c.l.b16 %v280
    %v1341 = vunpack.c.h.b16 %v280
    %v1342 = vunpack.c.l.b16 %v281
    %v1343 = vunpack.c.h.b16 %v281
    %v1344 = vunpack.c.l.b16 %v282
    %v1345 = vunpack.c.h.b16 %v282
    %v1346 = vunpack.c.l.b16 %v283
    %v1347 = vunpack.c.h.b16 %v283
    %v1348 = vunpack.c.l.b16 %v284
    %v1349 = vunpack.c.h.b16 %v284
    %v1350 = vunpack.c.l.b16 %v285
    %v1351 = vunpack.c.h.b16 %v285
    %v1352 = vunpack.c.l.b16 %v286
    %v1353 = vunpack.c.h.b16 %v286
    %v1354 = vunpack.c.l.b16 %v287
    %v1355 = vunpack.c.h.b16 %v287
    %v1356 = vunpack.c.l.b16 %v288
    %v1357 = vunpack.c.h.b16 %v288
    %v1358 = vunpack.c.l.b16 %v289
    %v1359 = vunpack.c.h.b16 %v289
    %v1360 = vunpack.c.l.b16 %v290
    %v1361 = vunpack.c.h.b16 %v290
    %v1362 = vunpack.c.l.b16 %v291
    %v1363 = vunpack.c.h.b16 %v291
    %v1364 = vunpack.c.l.b16 %v292
    %v1365 = vunpack.c.h.b16 %v292
    %v1366 = vunpack.c.l.b16 %v293
    %v1367 = vunpack.c.h.b16 %v293
    %v1368 = vunpack.c.l.b16 %v294
    %v1369 = vunpack.c.h.b16 %v294
    %v1370 = vunpack.c.l.b16 %v295
    %v1371 = vunpack.c.h.b16 %v295
    %v1372 = vunpack.c.l.b16 %v296
    %v1373 = vunpack.c.h.b16 %v296
    %v1374 = vunpack.c.l.b16 %v297
    %v1375 = vunpack.c.h.b16 %v297
    %v1376 = vunpack.c.l.b16 %v298
    %v1377 = vunpack.c.h.b16 %v298
    %v1378 = vunpack.c.l.b16 %v299
    %v1379 = vunpack.c.h.b16 %v299
    %v1380 = vunpack.c.l.b16 %v300
    %v1381 = vunpack.c.h.b16 %v300
    %v1382 = vunpack.c.l.b16 %v301
    %v1383 = vunpack.c.h.b16 %v301
    %v1384 = vunpack.c.l.b16 %v302
    %v1385 = vunpack.c.h.b16 %v302
    %v1386 = vunpack.c.l.b16 %v303
    %v1387 = vunpack.c.h.b16 %v303
    %v1388 = vunpack.c.l.b16 %v304
    %v1389 = vunpack.c.h.b16 %v304
    %v1390 = vunpack.c.l.b16 %v305
    %v1391 = vunpack.c.h.b16 %v305
    %v1392 = vunpack.c.l.b16 %v306
    %v1393 = vunpack.c.h.b16 %v306
    %v1394 = vunpack.c.l.b16 %v307
    %v1395 = vunpack.c.h.b16 %v307
    %v1396 = vunpack.c.l.b16 %v308
    %v1397 = vunpack.c.h.b16 %v308
    %v1398 = vunpack.c.l.b16 %v309
    %v1399 = vunpack.c.h.b16 %v309
    %v1400 = vunpack.c.l.b16 %v310
    %v1401 = vunpack.c.h.b16 %v310
    %v1402 = vunpack.c.l.b16 %v311
    %v1403 = vunpack.c.h.b16 %v311
    %v1404 = vunpack.c.l.b16 %v312
    %v1405 = vunpack.c.h.b16 %v312
    %v1406 = vunpack.c.l.b16 %v313
    %v1407 = vunpack.c.h.b16 %v313
    %v1408 = vunpack.c.l.b16 %v314
    %v1409 = vunpack.c.h.b16 %v314
    %v1410 = vunpack.c.l.b16 %v315
    %v1411 = vunpack.c.h.b16 %v315
    %v1412 = vunpack.c.l.b16 %v316
    %v1413 = vunpack.c.h.b16 %v316
    %v1414 = vunpack.c.l.b16 %v317
    %v1415 = vunpack.c.h.b16 %v317
    %v1416 = vunpack.c.l.b16 %v318
    %v1417 = vunpack.c.h.b16 %v318
    %v1418 = vunpack.c.l.b16 %v319
    %v1419 = vunpack.c.h.b16 %v319
    %v1420 = vunpack.c.l.b16 %v320
    %v1421 = vunpack.c.h.b16 %v320
    %v1422 = vunpack.c.l.b16 %v321
    %v1423 = vunpack.c.h.b16 %v321
    %v1424 = vunpack.c.l.b16 %v322
    %v1425 = vunpack.c.h.b16 %v322
    %v1426 = vunpack.c.l.b16 %v323
    %v1427 = vunpack.c.h.b16 %v323
    %v1428 = vunpack.c.l.b16 %v324
    %v1429 = vunpack.c.h.b16 %v324
    %v1430 = vunpack.c.l.b16 %v325
    %v1431 = vunpack.c.h.b16 %v325
    %v1432 = vunpack.c.l.b16 %v326
    %v1433 = vunpack.c.h.b16 %v326
    %v1434 = vunpack.c.l.b16 %v327
    %v1435 = vunpack.c.h.b16 %v327
    %v1436 = vunpack.c.l.b16 %v328
    %v1437 = vunpack.c.h.b16 %v328
    %v1438 = vunpack.c.l.b16 %v329
    %v1439 = vunpack.c.h.b16 %v329
    %v1440 = vunpack.c.l.b16 %v330
    %v1441 = vunpack.c.h.b16 %v330
    %v1442 = vunpack.c.l.b16 %v331
    %v1443 = vunpack.c.h.b16 %v331
    %v1444 = vunpack.c.l.b16 %v332
    %v1445 = vunpack.c.h.b16 %v332
    %v1446 = vunpack.c.l.b16 %v333
    %v1447 = vunpack.c.h.b16 %v333
    %v1448 = vunpack.c.l.b16 %v334
    %v1449 = vunpack.c.h.b16 %v334
    %v1450 = vunpack.c.l.b16 %v335
    %v1451 = vunpack.c.h.b16 %v335
    %v1452 = vunpack.c.l.b16 %v336
    %v1453 = vunpack.c.h.b16 %v336
    %v1454 = vunpack.c.l.b16 %v337
    %v1455 = vunpack.c.h.b16 %v337
    %v1456 = vunpack.c.l.b16 %v338
    %v1457 = vunpack.c.h.b16 %v338
    %v1458 = vunpack.c.l.b16 %v339
    %v1459 = vunpack.c.h.b16 %v339
    %v1460 = vunpack.c.l.b16 %v340
    %v1461 = vunpack.c.h.b16 %v340
    %v1462 = vunpack.c.l.b16 %v341
    %v1463 = vunpack.c.h.b16 %v341
    %v1464 = vunpack.c.l.b16 %v342
    %v1465 = vunpack.c.h.b16 %v342
    %v1466 = vunpack.c.l.b16 %v343
    %v1467 = vunpack.c.h.b16 %v343
    %v1468 = vunpack.c.l.b16 %v344
    %v1469 = vunpack.c.h.b16 %v344
    %v1470 = vunpack.c.l.b16 %v345
    %v1471 = vunpack.c.h.b16 %v345
    %v1472 = vunpack.c.l.b16 %v346
    %v1473 = vunpack.c.h.b16 %v346
    %v1474 = vunpack.c.l.b16 %v347
    %v1475 = vunpack.c.h.b16 %v347
    %v1476 = vunpack.c.l.b16 %v348
    %v1477 = vunpack.c.h.b16 %v348
    %v1478 = vunpack.c.l.b16 %v349
    %v1479 = vunpack.c.h.b16 %v349
    %v1480 = vunpack.c.l.b16 %v350
    %v1481 = vunpack.c.h.b16 %v350
    %v1482 = vunpack.c.l.b16 %v351
    %v1483 = vunpack.c.h.b16 %v351
    %v1484 = vunpack.c.l.b16 %v352
    %v1485 = vunpack.c.h.b16 %v352
    %v1486 = vunpack.c.l.b16 %v353
    %v1487 = vunpack.c.h.b16 %v353
    %v1488 = vunpack.c.l.b16 %v354
    %v1489 = vunpack.c.h.b16 %v354
    %v1490 = vunpack.c.l.b16 %v355
    %v1491 = vunpack.c.h.b16 %v355
    %v1492 = vunpack.c.l.b16 %v356
    %v1493 = vunpack.c.h.b16 %v356
    %v1494 = vunpack.c.l.b16 %v357
    %v1495 = vunpack.c.h.b16 %v357
    %v1496 = vunpack.c.l.b16 %v358
    %v1497 = vunpack.c.h.b16 %v358
    %v1498 = vunpack.c.l.b16 %v359
    %v1499 = vunpack.c.h.b16 %v359
    %v1500 = vunpack.c.l.b16 %v360
    %v1501 = vunpack.c.h.b16 %v360
    %v1502 = vunpack.c.l.b16 %v361
    %v1503 = vunpack.c.h.b16 %v361
    %v1504 = vunpack.c.l.b16 %v362
    %v1505 = vunpack.c.h.b16 %v362
    %v1506 = vunpack.c.l.b16 %v363
    %v1507 = vunpack.c.h.b16 %v363
    %v1508 = vunpack.c.l.b16 %v364
    %v1509 = vunpack.c.h.b16 %v364
    %v1510 = vunpack.c.l.b16 %v365
    %v1511 = vunpack.c.h.b16 %v365
    %v1512 = vunpack.c.l.b16 %v366
    %v1513 = vunpack.c.h.b16 %v366
    %v1514 = vunpack.c.l.b16 %v367
    %v1515 = vunpack.c.h.b16 %v367
    %v1516 = vunpack.c.l.b16 %v368
    %v1517 = vunpack.c.h.b16 %v368
    %v1518 = vunpack.c.l.b16 %v369
    %v1519 = vunpack.c.h.b16 %v369
    %v1520 = vunpack.c.l.b16 %v370
    %v1521 = vunpack.c.h.b16 %v370
    %v1522 = vunpack.c.l.b16 %v371
    %v1523 = vunpack.c.h.b16 %v371
    %v1524 = vunpack.c.l.b16 %v372
    %v1525 = vunpack.c.h.b16 %v372
    %v1526 = vunpack.c.l.b16 %v373
    %v1527 = vunpack.c.h.b16 %v373
    %v1528 = vunpack.c.l.b16 %v374
    %v1529 = vunpack.c.h.b16 %v374
    %v1530 = vunpack.c.l.b16 %v375
    %v1531 = vunpack.c.h.b16 %v375
    %v1532 = vunpack.c.l.b16 %v376
    %v1533 = vunpack.c.h.b16 %v376
    %v1534 = vunpack.c.l.b16 %v377
    %v1535 = vunpack.c.h.b16 %v377
    %v1536 = vunpack.c.l.b16 %v378
    %v1537 = vunpack.c.h.b16 %v378
    %v1538 = vunpack.c.l.b16 %v379
    %v1539 = vunpack.c.h.b16 %v379
    %v1540 = vunpack.c.l.b16 %v380
    %v1541 = vunpack.c.h.b16 %v380
    %v1542 = vunpack.c.l.b16 %v381
    %v1543 = vunpack.c.h.b16 %v381
    %v1544 = vunpack.c.l.b16 %v382
    %v1545 = vunpack.c.h.b16 %v382
    %v1546 = vunpack.c.l.b16 %v383
    %v1547 = vunpack.c.h.b16 %v383
    %v1548 = vunpack.c.l.b16 %v384
    %v1549 = vunpack.c.h.b16 %v384
    %v1550 = vunpack.c.l.b16 %v385
    %v1551 = vunpack.c.h.b16 %v385
    %v1552 = vunpack.c.l.b16 %v386
    %v1553 = vunpack.c.h.b16 %v386
    %v1554 = vunpack.c.l.b16 %v387
    %v1555 = vunpack.c.h.b16 %v387
    %v1556 = vunpack.c.l.b16 %v388
    %v1557 = vunpack.c.h.b16 %v388
    %v1558 = vunpack.c.l.b16 %v389
    %v1559 = vunpack.c.h.b16 %v389
    %v1560 = vunpack.c.l.b16 %v390
    %v1561 = vunpack.c.h.b16 %v390
    %v1562 = vunpack.c.l.b16 %v391
    %v1563 = vunpack.c.h.b16 %v391
    %v1564 = vunpack.c.l.b16 %v392
    %v1565 = vunpack.c.h.b16 %v392
    %v1566 = vunpack.c.l.b16 %v393
    %v1567 = vunpack.c.h.b16 %v393
    %v1568 = vunpack.c.l.b16 %v394
    %v1569 = vunpack.c.h.b16 %v394
    %v1570 = vunpack.c.l.b16 %v395
    %v1571 = vunpack.c.h.b16 %v395
    %v1572 = vunpack.c.l.b16 %v396
    %v1573 = vunpack.c.h.b16 %v396
    %v1574 = vunpack.c.l.b16 %v397
    %v1575 = vunpack.c.h.b16 %v397
    %v1576 = vunpack.c.l.b16 %v398
    %v1577 = vunpack.c.h.b16 %v398
    %v1578 = vunpack.c.l.b16 %v399
    %v1579 = vunpack.c.h.b16 %v399
    %v1580 = vunpack.c.l.b16 %v400
    %v1581 = vunpack.c.h.b16 %v400
    %v1582 = vunpack.c.l.b16 %v401
    %v1583 = vunpack.c.h.b16 %v401
    %v1584 = vunpack.c.l.b16 %v402
    %v1585 = vunpack.c.h.b16 %v402
    %v1586 = vunpack.c.l.b16 %v403
    %v1587 = vunpack.c.h.b16 %v403
    %v1588 = vunpack.c.l.b16 %v404
    %v1589 = vunpack.c.h.b16 %v404
    %v1590 = vunpack.c.l.b16 %v405
    %v1591 = vunpack.c.h.b16 %v405
    %v1592 = vunpack.c.l.b16 %v406
    %v1593 = vunpack.c.h.b16 %v406
    %v1594 = vunpack.c.l.b16 %v407
    %v1595 = vunpack.c.h.b16 %v407
    %v1596 = vunpack.c.l.b16 %v408
    %v1597 = vunpack.c.h.b16 %v408
    %v1598 = vunpack.c.l.b16 %v409
    %v1599 = vunpack.c.h.b16 %v409
    %v1600 = vunpack.c.l.b16 %v410
    %v1601 = vunpack.c.h.b16 %v410
    %v1602 = vunpack.c.l.b16 %v411
    %v1603 = vunpack.c.h.b16 %v411
    %v1604 = vunpack.c.l.b16 %v412
    %v1605 = vunpack.c.h.b16 %v412
    %v1606 = vunpack.c.l.b16 %v413
    %v1607 = vunpack.c.h.b16 %v413
    %v1608 = vunpack.c.l.b16 %v414
    %v1609 = vunpack.c.h.b16 %v414
    %v1610 = vunpack.c.l.b16 %v415
    %v1611 = vunpack.c.h.b16 %v415
    %v1612 = vunpack.c.l.b16 %v416
    %v1613 = vunpack.c.h.b16 %v416
    %v1614 = vunpack.c.l.b16 %v417
    %v1615 = vunpack.c.h.b16 %v417
    %v1616 = vunpack.c.l.b16 %v418
    %v1617 = vunpack.c.h.b16 %v418
    %v1618 = vunpack.c.l.b16 %v419
    %v1619 = vunpack.c.h.b16 %v419
    %v1620 = vunpack.c.l.b16 %v420
    %v1621 = vunpack.c.h.b16 %v420
    %v1622 = vunpack.c.l.b16 %v421
    %v1623 = vunpack.c.h.b16 %v421
    %v1624 = vunpack.c.l.b16 %v422
    %v1625 = vunpack.c.h.b16 %v422
    %v1626 = vunpack.c.l.b16 %v423
    %v1627 = vunpack.c.h.b16 %v423
    %v1628 = vunpack.c.l.b16 %v424
    %v1629 = vunpack.c.h.b16 %v424
    %v1630 = vunpack.c.l.b16 %v425
    %v1631 = vunpack.c.h.b16 %v425
    %v1632 = vunpack.c.l.b16 %v426
    %v1633 = vunpack.c.h.b16 %v426
    %v1634 = vunpack.c.l.b16 %v427
    %v1635 = vunpack.c.h.b16 %v427
    %v1636 = vunpack.c.l.b16 %v428
    %v1637 = vunpack.c.h.b16 %v428
    %v1638 = vunpack.c.l.b16 %v429
    %v1639 = vunpack.c.h.b16 %v429
    %v1640 = vunpack.c.l.b16 %v430
    %v1641 = vunpack.c.h.b16 %v430
    %v1642 = vunpack.c.l.b16 %v431
    %v1643 = vunpack.c.h.b16 %v431
    %v1644 = vunpack.c.l.b16 %v432
    %v1645 = vunpack.c.h.b16 %v432
    %v1646 = vunpack.c.l.b16 %v433
    %v1647 = vunpack.c.h.b16 %v433
    %v1648 = vunpack.c.l.b16 %v434
    %v1649 = vunpack.c.h.b16 %v434
    %v1650 = vunpack.c.l.b16 %v435
    %v1651 = vunpack.c.h.b16 %v435
    %v1652 = vunpack.c.l.b16 %v436
    %v1653 = vunpack.c.h.b16 %v436
    %v1654 = vunpack.c.l.b16 %v437
    %v1655 = vunpack.c.h.b16 %v437
    %v1656 = vunpack.c.l.b16 %v438
    %v1657 = vunpack.c.h.b16 %v438
    %v1658 = vunpack.c.l.b16 %v439
    %v1659 = vunpack.c.h.b16 %v439
    %v1660 = vunpack.c.l.b16 %v440
    %v1661 = vunpack.c.h.b16 %v440
    %v1662 = vunpack.c.l.b16 %v441
    %v1663 = vunpack.c.h.b16 %v441
    %v1664 = vunpack.c.l.b16 %v442
    %v1665 = vunpack.c.h.b16 %v442
    %v1666 = vunpack.c.l.b16 %v443
    %v1667 = vunpack.c.h.b16 %v443
    %v1668 = vunpack.c.l.b16 %v444
    %v1669 = vunpack.c.h.b16 %v444
    %v1670 = vunpack.c.l.b16 %v445
    %v1671 = vunpack.c.h.b16 %v445
    %v1672 = vunpack.c.l.b16 %v446
    %v1673 = vunpack.c.h.b16 %v446
    %v1674 = vunpack.c.l.b16 %v447
    %v1675 = vunpack.c.h.b16 %v447
    %v1676 = vunpack.c.l.b16 %v448
    %v1677 = vunpack.c.h.b16 %v448
    %v1678 = vunpack.c.l.b16 %v449
    %v1679 = vunpack.c.h.b16 %v449
    %v1680 = vunpack.c.l.b16 %v450
    %v1681 = vunpack.c.h.b16 %v450
    %v1682 = vunpack.c.l.b16 %v451
    %v1683 = vunpack.c.h.b16 %v451
    %v1684 = vunpack.c.l.b16 %v452
    %v1685 = vunpack.c.h.b16 %v452
    %v1686 = vunpack.c.l.b16 %v453
    %v1687 = vunpack.c.h.b16 %v453
    %v1688 = vunpack.c.l.b16 %v454
    %v1689 = vunpack.c.h.b16 %v454
    %v1690 = vunpack.c.l.b16 %v455
    %v1691 = vunpack.c.h.b16 %v455
    %v1692 = vunpack.c.l.b16 %v456
    %v1693 = vunpack.c.h.b16 %v456
    %v1694 = vunpack.c.l.b16 %v457
    %v1695 = vunpack.c.h.b16 %v457
    %v1696 = vunpack.c.l.b16 %v458
    %v1697 = vunpack.c.h.b16 %v458
    %v1698 = vunpack.c.l.b16 %v459
    %v1699 = vunpack.c.h.b16 %v459
    %v1700 = vunpack.c.l.b16 %v460
    %v1701 = vunpack.c.h.b16 %v460
    %v1702 = vunpack.c.l.b16 %v461
    %v1703 = vunpack.c.h.b16 %v461
    %v1704 = vunpack.c.l.b16 %v462
    %v1705 = vunpack.c.h.b16 %v462
    %v1706 = vunpack.c.l.b16 %v463
    %v1707 = vunpack.c.h.b16 %v463
    %v1708 = vunpack.c.l.b16 %v464
    %v1709 = vunpack.c.h.b16 %v464
    %v1710 = vunpack.c.l.b16 %v465
    %v1711 = vunpack.c.h.b16 %v465
    %v1712 = vunpack.c.l.b16 %v466
    %v1713 = vunpack.c.h.b16 %v466
    %v1714 = vunpack.c.l.b16 %v467
    %v1715 = vunpack.c.h.b16 %v467
    %v1716 = vpack.c.b16 %v956, %v948
    %v1717 = vpack.c.b16 %v957, %v949
    %v1718 = vpack.c.b16 %v958, %v950
    %v1719 = vpack.c.b16 %v959, %v951
    %v1720 = vpack.c.b16 %v960, %v952
    %v1721 = vpack.c.b16 %v961, %v953
    %v1722 = vpack.c.b16 %v962, %v954
    %v1723 = vpack.c.b16 %v963, %v955
    %v1724 = vpack.c.b16 %v972, %v964
    %v1725 = vpack.c.b16 %v973, %v965
    %v1726 = vpack.c.b16 %v974, %v966
    %v1727 = vpack.c.b16 %v975, %v967
    %v1728 = vpack.c.b16 %v976, %v968
    %v1729 = vpack.c.b16 %v977, %v969
    %v1730 = vpack.c.b16 %v978, %v970
    %v1731 = vpack.c.b16 %v979, %v971
    %v1732 = vpack.c.b16 %v988, %v980
    %v1733 = vpack.c.b16 %v989, %v981
    %v1734 = vpack.c.b16 %v990, %v982
    %v1735 = vpack.c.b16 %v991, %v983
    %v1736 = vpack.c.b16 %v992, %v984
    %v1737 = vpack.c.b16 %v993, %v985
    %v1738 = vpack.c.b16 %v994, %v986
    %v1739 = vpack.c.b16 %v995, %v987
    %v1740 = vpack.c.b16 %v1004, %v996
    %v1741 = vpack.c.b16 %v1005, %v997
    %v1742 = vpack.c.b16 %v1006, %v998
    %v1743 = vpack.c.b16 %v1007, %v999
    %v1744 = vpack.c.b16 %v1008, %v1000
    %v1745 = vpack.c.b16 %v1009, %v1001
    %v1746 = vpack.c.b16 %v1010, %v1002
    %v1747 = vpack.c.b16 %v1011, %v1003
    %v1748 = vpack.c.b16 %v1020, %v1012
    %v1749 = vpack.c.b16 %v1021, %v1013
    %v1750 = vpack.c.b16 %v1022, %v1014
    %v1751 = vpack.c.b16 %v1023, %v1015
    %v1752 = vpack.c.b16 %v1024, %v1016
    %v1753 = vpack.c.b16 %v1025, %v1017
    %v1754 = vpack.c.b16 %v1026, %v1018
    %v1755 = vpack.c.b16 %v1027, %v1019
    %v1756 = vpack.c.b16 %v1036, %v1028
    %v1757 = vpack.c.b16 %v1037, %v1029
    %v1758 = vpack.c.b16 %v1038, %v1030
    %v1759 = vpack.c.b16 %v1039, %v1031
    %v1760 = vpack.c.b16 %v1040, %v1032
    %v1761 = vpack.c.b16 %v1041, %v1033
    %v1762 = vpack.c.b16 %v1042, %v1034
    %v1763 = vpack.c.b16 %v1043, %v1035
    %v1764 = vpack.c.b16 %v1052, %v1044
    %v1765 = vpack.c.b16 %v1053, %v1045
    %v1766 = vpack.c.b16 %v1054, %v1046
    %v1767 = vpack.c.b16 %v1055, %v1047
    %v1768 = vpack.c.b16 %v1056, %v1048
    %v1769 = vpack.c.b16 %v1057, %v1049
    %v1770 = vpack.c.b16 %v1058, %v1050
    %v1771 = vpack.c.b16 %v1059, %v1051
    %v1772 = vpack.c.b16 %v1068, %v1060
    %v1773 = vpack.c.b16 %v1069, %v1061
    %v1774 = vpack.c.b16 %v1070, %v1062
    %v1775 = vpack.c.b16 %v1071, %v1063
    %v1776 = vpack.c.b16 %v1072, %v1064
    %v1777 = vpack.c.b16 %v1073, %v1065
    %v1778 = vpack.c.b16 %v1074, %v1066
    %v1779 = vpack.c.b16 %v1075, %v1067
    %v1780 = vpack.c.b16 %v1084, %v1076
    %v1781 = vpack.c.b16 %v1085, %v1077
    %v1782 = vpack.c.b16 %v1086, %v1078
    %v1783 = vpack.c.b16 %v1087, %v1079
    %v1784 = vpack.c.b16 %v1088, %v1080
    %v1785 = vpack.c.b16 %v1089, %v1081
    %v1786 = vpack.c.b16 %v1090, %v1082
    %v1787 = vpack.c.b16 %v1091, %v1083
    %v1788 = vpack.c.b16 %v1100, %v1092
    %v1789 = vpack.c.b16 %v1101, %v1093
    %v1790 = vpack.c.b16 %v1102, %v1094
    %v1791 = vpack.c.b16 %v1103, %v1095
    %v1792 = vpack.c.b16 %v1104, %v1096
    %v1793 = vpack.c.b16 %v1105, %v1097
    %v1794 = vpack.c.b16 %v1106, %v1098
    %v1795 = vpack.c.b16 %v1107, %v1099
    %v1796 = vpack.c.b16 %v1116, %v1108
    %v1797 = vpack.c.b16 %v1117, %v1109
    %v1798 = vpack.c.b16 %v1118, %v1110
    %v1799 = vpack.c.b16 %v1119, %v1111
    %v1800 = vpack.c.b16 %v1120, %v1112
    %v1801 = vpack.c.b16 %v1121, %v1113
    %v1802 = vpack.c.b16 %v1122, %v1114
    %v1803 = vpack.c.b16 %v1123, %v1115
    %v1804 = vpack.c.b16 %v1132, %v1124
    %v1805 = vpack.c.b16 %v1133, %v1125
    %v1806 = vpack.c.b16 %v1134, %v1126
    %v1807 = vpack.c.b16 %v1135, %v1127
    %v1808 = vpack.c.b16 %v1136, %v1128
    %v1809 = vpack.c.b16 %v1137, %v1129
    %v1810 = vpack.c.b16 %v1138, %v1130
    %v1811 = vpack.c.b16 %v1139, %v1131
    %v1812 = vpack.c.b16 %v1148, %v1140
    %v1813 = vpack.c.b16 %v1149, %v1141
    %v1814 = vpack.c.b16 %v1150, %v1142
    %v1815 = vpack.c.b16 %v1151, %v1143
    %v1816 = vpack.c.b16 %v1152, %v1144
    %v1817 = vpack.c.b16 %v1153, %v1145
    %v1818 = vpack.c.b16 %v1154, %v1146
    %v1819 = vpack.c.b16 %v1155, %v1147
    %v1820 = vpack.c.b16 %v1164, %v1156
    %v1821 = vpack.c.b16 %v1165, %v1157
    %v1822 = vpack.c.b16 %v1166, %v1158
    %v1823 = vpack.c.b16 %v1167, %v1159
    %v1824 = vpack.c.b16 %v1168, %v1160
    %v1825 = vpack.c.b16 %v1169, %v1161
    %v1826 = vpack.c.b16 %v1170, %v1162
    %v1827 = vpack.c.b16 %v1171, %v1163
    %v1828 = vpack.c.b16 %v1180, %v1172
    %v1829 = vpack.c.b16 %v1181, %v1173
    %v1830 = vpack.c.b16 %v1182, %v1174
    %v1831 = vpack.c.b16 %v1183, %v1175
    %v1832 = vpack.c.b16 %v1184, %v1176
    %v1833 = vpack.c.b16 %v1185, %v1177
    %v1834 = vpack.c.b16 %v1186, %v1178
    %v1835 = vpack.c.b16 %v1187, %v1179
    %v1836 = vpack.c.b16 %v1196, %v1188
    %v1837 = vpack.c.b16 %v1197, %v1189
    %v1838 = vpack.c.b16 %v1198, %v1190
    %v1839 = vpack.c.b16 %v1199, %v1191
    %v1840 = vpack.c.b16 %v1200, %v1192
    %v1841 = vpack.c.b16 %v1201, %v1193
    %v1842 = vpack.c.b16 %v1202, %v1194
    %v1843 = vpack.c.b16 %v1203, %v1195
    %v1844 = vpack.c.b16 %v1212, %v1204
    %v1845 = vpack.c.b16 %v1213, %v1205
    %v1846 = vpack.c.b16 %v1214, %v1206
    %v1847 = vpack.c.b16 %v1215, %v1207
    %v1848 = vpack.c.b16 %v1216, %v1208
    %v1849 = vpack.c.b16 %v1217, %v1209
    %v1850 = vpack.c.b16 %v1218, %v1210
    %v1851 = vpack.c.b16 %v1219, %v1211
    %v1852 = vpack.c.b16 %v1228, %v1220
    %v1853 = vpack.c.b16 %v1229, %v1221
    %v1854 = vpack.c.b16 %v1230, %v1222
    %v1855 = vpack.c.b16 %v1231, %v1223
    %v1856 = vpack.c.b16 %v1232, %v1224
    %v1857 = vpack.c.b16 %v1233, %v1225
    %v1858 = vpack.c.b16 %v1234, %v1226
    %v1859 = vpack.c.b16 %v1235, %v1227
    %v1860 = vpack.c.b16 %v1244, %v1236
    %v1861 = vpack.c.b16 %v1245, %v1237
    %v1862 = vpack.c.b16 %v1246, %v1238
    %v1863 = vpack.c.b16 %v1247, %v1239
    %v1864 = vpack.c.b16 %v1248, %v1240
    %v1865 = vpack.c.b16 %v1249, %v1241
    %v1866 = vpack.c.b16 %v1250, %v1242
    %v1867 = vpack.c.b16 %v1251, %v1243
    %v1868 = vpack.c.b16 %v1260, %v1252
    %v1869 = vpack.c.b16 %v1261, %v1253
    %v1870 = vpack.c.b16 %v1262, %v1254
    %v1871 = vpack.c.b16 %v1263, %v1255
    %v1872 = vpack.c.b16 %v1264, %v1256
    %v1873 = vpack.c.b16 %v1265, %v1257
    %v1874 = vpack.c.b16 %v1266, %v1258
    %v1875 = vpack.c.b16 %v1267, %v1259
    %v1876 = vpack.c.b16 %v1276, %v1268
    %v1877 = vpack.c.b16 %v1277, %v1269
    %v1878 = vpack.c.b16 %v1278, %v1270
    %v1879 = vpack.c.b16 %v1279, %v1271
    %v1880 = vpack.c.b16 %v1280, %v1272
    %v1881 = vpack.c.b16 %v1281, %v1273
    %v1882 = vpack.c.b16 %v1282, %v1274
    %v1883 = vpack.c.b16 %v1283, %v1275
    %v1884 = vpack.c.b16 %v1292, %v1284
    %v1885 = vpack.c.b16 %v1293, %v1285
    %v1886 = vpack.c.b16 %v1294, %v1286
    %v1887 = vpack.c.b16 %v1295, %v1287
    %v1888 = vpack.c.b16 %v1296, %v1288
    %v1889 = vpack.c.b16 %v1297, %v1289
    %v1890 = vpack.c.b16 %v1298, %v1290
    %v1891 = vpack.c.b16 %v1299, %v1291
    %v1892 = vpack.c.b16 %v1308, %v1300
    %v1893 = vpack.c.b16 %v1309, %v1301
    %v1894 = vpack.c.b16 %v1310, %v1302
    %v1895 = vpack.c.b16 %v1311, %v1303
    %v1896 = vpack.c.b16 %v1312, %v1304
    %v1897 = vpack.c.b16 %v1313, %v1305
    %v1898 = vpack.c.b16 %v1314, %v1306
    %v1899 = vpack.c.b16 %v1315, %v1307
    %v1900 = vpack.c.b16 %v1324, %v1316
    %v1901 = vpack.c.b16 %v1325, %v1317
    %v1902 = vpack.c.b16 %v1326, %v1318
    %v1903 = vpack.c.b16 %v1327, %v1319
    %v1904 = vpack.c.b16 %v1328, %v1320
    %v1905 = vpack.c.b16 %v1329, %v1321
    %v1906 = vpack.c.b16 %v1330, %v1322
    %v1907 = vpack.c.b16 %v1331, %v1323
    %v1908 = vpack.c.b16 %v1340, %v1332
    %v1909 = vpack.c.b16 %v1341, %v1333
    %v1910 = vpack.c.b16 %v1342, %v1334
    %v1911 = vpack.c.b16 %v1343, %v1335
    %v1912 = vpack.c.b16 %v1344, %v1336
    %v1913 = vpack.c.b16 %v1345, %v1337
    %v1914 = vpack.c.b16 %v1346, %v1338
    %v1915 = vpack.c.b16 %v1347, %v1339
    %v1916 = vpack.c.b16 %v1356, %v1348
    %v1917 = vpack.c.b16 %v1357, %v1349
    %v1918 = vpack.c.b16 %v1358, %v1350
    %v1919 = vpack.c.b16 %v1359, %v1351
    %v1920 = vpack.c.b16 %v1360, %v1352
    %v1921 = vpack.c.b16 %v1361, %v1353
    %v1922 = vpack.c.b16 %v1362, %v1354
    %v1923 = vpack.c.b16 %v1363, %v1355
    %v1924 = vpack.c.b16 %v1372, %v1364
    %v1925 = vpack.c.b16 %v1373, %v1365
    %v1926 = vpack.c.b16 %v1374, %v1366
    %v1927 = vpack.c.b16 %v1375, %v1367
    %v1928 = vpack.c.b16 %v1376, %v1368
    %v1929 = vpack.c.b16 %v1377, %v1369
    %v1930 = vpack.c.b16 %v1378, %v1370
    %v1931 = vpack.c.b16 %v1379, %v1371
    %v1932 = vpack.c.b16 %v1388, %v1380
    %v1933 = vpack.c.b16 %v1389, %v1381
    %v1934 = vpack.c.b16 %v1390, %v1382
    %v1935 = vpack.c.b16 %v1391, %v1383
    %v1936 = vpack.c.b16 %v1392, %v1384
    %v1937 = vpack.c.b16 %v1393, %v1385
    %v1938 = vpack.c.b16 %v1394, %v1386
    %v1939 = vpack.c.b16 %v1395, %v1387
    %v1940 = vpack.c.b16 %v1404, %v1396
    %v1941 = vpack.c.b16 %v1405, %v1397
    %v1942 = vpack.c.b16 %v1406, %v1398
    %v1943 = vpack.c.b16 %v1407, %v1399
    %v1944 = vpack.c.b16 %v1408, %v1400
    %v1945 = vpack.c.b16 %v1409, %v1401
    %v1946 = vpack.c.b16 %v1410, %v1402
    %v1947 = vpack.c.b16 %v1411, %v1403
    %v1948 = vpack.c.b16 %v1420, %v1412
    %v1949 = vpack.c.b16 %v1421, %v1413
    %v1950 = vpack.c.b16 %v1422, %v1414
    %v1951 = vpack.c.b16 %v1423, %v1415
    %v1952 = vpack.c.b16 %v1424, %v1416
    %v1953 = vpack.c.b16 %v1425, %v1417
    %v1954 = vpack.c.b16 %v1426, %v1418
    %v1955 = vpack.c.b16 %v1427, %v1419
    %v1956 = vpack.c.b16 %v1436, %v1428
    %v1957 = vpack.c.b16 %v1437, %v1429
    %v1958 = vpack.c.b16 %v1438, %v1430
    %v1959 = vpack.c.b16 %v1439, %v1431
    %v1960 = vpack.c.b16 %v1440, %v1432
    %v1961 = vpack.c.b16 %v1441, %v1433
    %v1962 = vpack.c.b16 %v1442, %v1434
    %v1963 = vpack.c.b16 %v1443, %v1435
    %v1964 = vpack.c.b16 %v1452, %v1444
    %v1965 = vpack.c.b16 %v1453, %v1445
    %v1966 = vpack.c.b16 %v1454, %v1446
    %v1967 = vpack.c.b16 %v1455, %v1447
    %v1968 = vpack.c.b16 %v1456, %v1448
    %v1969 = vpack.c.b16 %v1457, %v1449
    %v1970 = vpack.c.b16 %v1458, %v1450
    %v1971 = vpack.c.b16 %v1459, %v1451
    %v1972 = vpack.c.b16 %v1468, %v1460
    %v1973 = vpack.c.b16 %v1469, %v1461
    %v1974 = vpack.c.b16 %v1470, %v1462
    %v1975 = vpack.c.b16 %v1471, %v1463
    %v1976 = vpack.c.b16 %v1472, %v1464
    %v1977 = vpack.c.b16 %v1473, %v1465
    %v1978 = vpack.c.b16 %v1474, %v1466
    %v1979 = vpack.c.b16 %v1475, %v1467
    %v1980 = vpack.c.b16 %v1484, %v1476
    %v1981 = vpack.c.b16 %v1485, %v1477
    %v1982 = vpack.c.b16 %v1486, %v1478
    %v1983 = vpack.c.b16 %v1487, %v1479
    %v1984 = vpack.c.b16 %v1488, %v1480
    %v1985 = vpack.c.b16 %v1489, %v1481
    %v1986 = vpack.c.b16 %v1490, %v1482
    %v1987 = vpack.c.b16 %v1491, %v1483
    %v1988 = vpack.c.b16 %v1500, %v1492
    %v1989 = vpack.c.b16 %v1501, %v1493
    %v1990 = vpack.c.b16 %v1502, %v1494
    %v1991 = vpack.c.b16 %v1503, %v1495
    %v1992 = vpack.c.b16 %v1504, %v1496
    %v1993 = vpack.c.b16 %v1505, %v1497
    %v1994 = vpack.c.b16 %v1506, %v1498
    %v1995 = vpack.c.b16 %v1507, %v1499
    %v1996 = vpack.c.b16 %v1516, %v1508
    %v1997 = vpack.c.b16 %v1517, %v1509
    %v1998 = vpack.c.b16 %v1518, %v1510
    %v1999 = vpack.c.b16 %v1519, %v1511
    %v2000 = vpack.c.b16 %v1520, %v1512
    %v2001 = vpack.c.b16 %v1521, %v1513
    %v2002 = vpack.c.b16 %v1522, %v1514
    %v2003 = vpack.c.b16 %v1523, %v1515
    %v2004 = vpack.c.b16 %v1532, %v1524
    %v2005 = vpack.c.b16 %v1533, %v1525
    %v2006 = vpack.c.b16 %v1534, %v1526
    %v2007 = vpack.c.b16 %v1535, %v1527
    %v2008 = vpack.c.b16 %v1536, %v1528
    %v2009 = vpack.c.b16 %v1537, %v1529
    %v2010 = vpack.c.b16 %v1538, %v1530
    %v2011 = vpack.c.b16 %v1539, %v1531
    %v2012 = vpack.c.b16 %v1548, %v1540
    %v2013 = vpack.c.b16 %v1549, %v1541
    %v2014 = vpack.c.b16 %v1550, %v1542
    %v2015 = vpack.c.b16 %v1551, %v1543
    %v2016 = vpack.c.b16 %v1552, %v1544
    %v2017 = vpack.c.b16 %v1553, %v1545
    %v2018 = vpack.c.b16 %v1554, %v1546
    %v2019 = vpack.c.b16 %v1555, %v1547
    %v2020 = vpack.c.b16 %v1564, %v1556
    %v2021 = vpack.c.b16 %v1565, %v1557
    %v2022 = vpack.c.b16 %v1566, %v1558
    %v2023 = vpack.c.b16 %v1567, %v1559
    %v2024 = vpack.c.b16 %v1568, %v1560
    %v2025 = vpack.c.b16 %v1569, %v1561
    %v2026 = vpack.c.b16 %v1570, %v1562
    %v2027 = vpack.c.b16 %v1571, %v1563
    %v2028 = vpack.c.b16 %v1580, %v1572
    %v2029 = vpack.c.b16 %v1581, %v1573
    %v2030 = vpack.c.b16 %v1582, %v1574
    %v2031 = vpack.c.b16 %v1583, %v1575
    %v2032 = vpack.c.b16 %v1584, %v1576
    %v2033 = vpack.c.b16 %v1585, %v1577
    %v2034 = vpack.c.b16 %v1586, %v1578
    %v2035 = vpack.c.b16 %v1587, %v1579
    %v2036 = vpack.c.b16 %v1596, %v1588
    %v2037 = vpack.c.b16 %v1597, %v1589
    %v2038 = vpack.c.b16 %v1598, %v1590
    %v2039 = vpack.c.b16 %v1599, %v1591
    %v2040 = vpack.c.b16 %v1600, %v1592
    %v2041 = vpack.c.b16 %v1601, %v1593
    %v2042 = vpack.c.b16 %v1602, %v1594
    %v2043 = vpack.c.b16 %v1603, %v1595
    %v2044 = vpack.c.b16 %v1612, %v1604
    %v2045 = vpack.c.b16 %v1613, %v1605
    %v2046 = vpack.c.b16 %v1614, %v1606
    %v2047 = vpack.c.b16 %v1615, %v1607
    %v2048 = vpack.c.b16 %v1616, %v1608
    %v2049 = vpack.c.b16 %v1617, %v1609
    %v2050 = vpack.c.b16 %v1618, %v1610
    %v2051 = vpack.c.b16 %v1619, %v1611
    %v2052 = vpack.c.b16 %v1628, %v1620
    %v2053 = vpack.c.b16 %v1629, %v1621
    %v2054 = vpack.c.b16 %v1630, %v1622
    %v2055 = vpack.c.b16 %v1631, %v1623
    %v2056 = vpack.c.b16 %v1632, %v1624
    %v2057 = vpack.c.b16 %v1633, %v1625
    %v2058 = vpack.c.b16 %v1634, %v1626
    %v2059 = vpack.c.b16 %v1635, %v1627
    %v2060 = vpack.c.b16 %v1644, %v1636
    %v2061 = vpack.c.b16 %v1645, %v1637
    %v2062 = vpack.c.b16 %v1646, %v1638
    %v2063 = vpack.c.b16 %v1647, %v1639
    %v2064 = vpack.c.b16 %v1648, %v1640
    %v2065 = vpack.c.b16 %v1649, %v1641
    %v2066 = vpack.c.b16 %v1650, %v1642
    %v2067 = vpack.c.b16 %v1651, %v1643
    %v2068 = vpack.c.b16 %v1660, %v1652
    %v2069 = vpack.c.b16 %v1661, %v1653
    %v2070 = vpack.c.b16 %v1662, %v1654
    %v2071 = vpack.c.b16 %v1663, %v1655
    %v2072 = vpack.c.b16 %v1664, %v1656
    %v2073 = vpack.c.b16 %v1665, %v1657
    %v2074 = vpack.c.b16 %v1666, %v1658
    %v2075 = vpack.c.b16 %v1667, %v1659
    %v2076 = vpack.c.b16 %v1676, %v1668
    %v2077 = vpack.c.b16 %v1677, %v1669
    %v2078 = vpack.c.b16 %v1678, %v1670
    %v2079 = vpack.c.b16 %v1679, %v1671
    %v2080 = vpack.c.b16 %v1680, %v1672
    %v2081 = vpack.c.b16 %v1681, %v1673
    %v2082 = vpack.c.b16 %v1682, %v1674
    %v2083 = vpack.c.b16 %v1683, %v1675
    %v2084 = vpack.c.b16 %v1692, %v1684
    %v2085 = vpack.c.b16 %v1693, %v1685
    %v2086 = vpack.c.b16 %v1694, %v1686
    %v2087 = vpack.c.b16 %v1695, %v1687
    %v2088 = vpack.c.b16 %v1696, %v1688
    %v2089 = vpack.c.b16 %v1697, %v1689
    %v2090 = vpack.c.b16 %v1698, %v1690
    %v2091 = vpack.c.b16 %v1699, %v1691
    %v2092 = vpack.c.b16 %v1708, %v1700
    %v2093 = vpack.c.b16 %v1709, %v1701
    %v2094 = vpack.c.b16 %v1710, %v1702
    %v2095 = vpack.c.b16 %v1711, %v1703
    %v2096 = vpack.c.b16 %v1712, %v1704
    %v2097 = vpack.c.b16 %v1713, %v1705
    %v2098 = vpack.c.b16 %v1714, %v1706
    %v2099 = vpack.c.b16 %v1715, %v1707
    %2484 = vmatprep.subr.bf16.mxu0 %v1717
    %2485 = vmatpush1.bf16.msra.mxu0 %v1716
    %2486 = vmatprep.subr.bf16.mxu0 %v1725
    %2487 = vmatpush1.bf16.msra.mxu0 %v1724
    %2488 = vmatprep.subr.bf16.mxu0 %v1733
    %2489 = vmatpush1.bf16.msra.mxu0 %v1732
    %2490 = vmatprep.subr.bf16.mxu0 %v1741
    %2491 = vmatpush1.bf16.msra.mxu0 %v1740
    %2492 = vmatprep.subr.bf16.mxu0 %v1749
    %2493 = vmatpush1.bf16.msra.mxu0 %v1748
    %2494 = vmatprep.subr.bf16.mxu0 %v1757
    %2495 = vmatpush1.bf16.msra.mxu0 %v1756
    %2496 = vmatprep.subr.bf16.mxu0 %v1765
    %2497 = vmatpush1.bf16.msra.mxu0 %v1764
    %2498 = vmatprep.subr.bf16.mxu0 %v1773
    %2499 = vmatpush1.bf16.msra.mxu0 %v1772
    %2500 = vmatprep.subr.bf16.mxu0 %v1781
    %2501 = vmatpush1.bf16.msra.mxu0 %v1780
    %2502 = vmatprep.subr.bf16.mxu0 %v1789
    %2503 = vmatpush1.bf16.msra.mxu0 %v1788
    %2504 = vmatprep.subr.bf16.mxu0 %v1797
    %2505 = vmatpush1.bf16.msra.mxu0 %v1796
    %2506 = vmatprep.subr.bf16.mxu0 %v1805
    %2507 = vmatpush1.bf16.msra.mxu0 %v1804
    %2508 = vmatprep.subr.bf16.mxu0 %v1813
    %2509 = vmatpush1.bf16.msra.mxu0 %v1812
    %2510 = vmatprep.subr.bf16.mxu0 %v1821
    %2511 = vmatpush1.bf16.msra.mxu0 %v1820
    %2512 = vmatprep.subr.bf16.mxu0 %v1829
    %2513 = vmatpush1.bf16.msra.mxu0 %v1828
    %2514 = vmatprep.subr.bf16.mxu0 %v1837
    %2515 = vmatpush1.bf16.msra.mxu0 %v1836
    %2516 = vmatprep.mubr.bf16.mxu0 %v548
    %2517 = vmatmul.mubr.bf16.gmra.mrb[0].mxu0 %v534
    %v2518 = vpop.f32.mrb[0].mxu0
    %v2519 = vadd.f32 %v473, %v2518
    %v2520 = vpop.f32.mrb[0].mxu0
    %v2521 = vadd.f32 %v477, %v2520
    %v2522 = vpop.f32.mrb[0].mxu0
    %v2523 = vpop.f32.mrb[0].mxu0
    %2524 = vdwg.mxu0
    %2525 = vmatprep.subr.bf16.mxu0 %v1845
    %2526 = vmatpush1.bf16.msra.mxu0 %v1844
    %2527 = vmatprep.subr.bf16.mxu0 %v1853
    %2528 = vmatpush1.bf16.msra.mxu0 %v1852
    %2529 = vmatprep.subr.bf16.mxu0 %v1861
    %2530 = vmatpush1.bf16.msra.mxu0 %v1860
    %2531 = vmatprep.subr.bf16.mxu0 %v1869
    %2532 = vmatpush1.bf16.msra.mxu0 %v1868
    %2533 = vmatprep.subr.bf16.mxu0 %v1877
    %2534 = vmatpush1.bf16.msra.mxu0 %v1876
    %2535 = vmatprep.subr.bf16.mxu0 %v1885
    %2536 = vmatpush1.bf16.msra.mxu0 %v1884
    %2537 = vmatprep.subr.bf16.mxu0 %v1893
    %2538 = vmatpush1.bf16.msra.mxu0 %v1892
    %2539 = vmatprep.subr.bf16.mxu0 %v1901
    %2540 = vmatpush1.bf16.msra.mxu0 %v1900
    %2541 = vmatprep.subr.bf16.mxu0 %v1909
    %2542 = vmatpush1.bf16.msra.mxu0 %v1908
    %2543 = vmatprep.subr.bf16.mxu0 %v1917
    %2544 = vmatpush1.bf16.msra.mxu0 %v1916
    %2545 = vmatprep.subr.bf16.mxu0 %v1925
    %2546 = vmatpush1.bf16.msra.mxu0 %v1924
    %2547 = vmatprep.subr.bf16.mxu0 %v1933
    %2548 = vmatpush1.bf16.msra.mxu0 %v1932
    %2549 = vmatprep.subr.bf16.mxu0 %v1941
    %2550 = vmatpush1.bf16.msra.mxu0 %v1940
    %2551 = vmatprep.subr.bf16.mxu0 %v1949
    %2552 = vmatpush1.bf16.msra.mxu0 %v1948
    %2553 = vmatprep.subr.bf16.mxu0 %v1957
    %2554 = vmatpush1.bf16.msra.mxu0 %v1956
    %2555 = vmatprep.subr.bf16.mxu0 %v1965
    %2556 = vmatpush1.bf16.msra.mxu0 %v1964
    %2557 = vmatprep.mubr.bf16.mxu0 %v557
    %2558 = vmatmul.mubr.bf16.gmra.mrb[0].mxu0 %v556
    %v2559 = vpop.f32.mrb[0].mxu0
    %v2560 = vadd.f32 %v2519, %v2559
    %v2561 = vpop.f32.mrb[0].mxu0
    %v2562 = vadd.f32 %v2521, %v2561
    %v2563 = vpop.f32.mrb[0].mxu0
    %v2564 = vpop.f32.mrb[0].mxu0
    %2565 = vdwg.mxu0
    %2566 = vmatprep.subr.bf16.mxu0 %v1973
    %2567 = vmatpush1.bf16.msra.mxu0 %v1972
    %2568 = vmatprep.subr.bf16.mxu0 %v1981
    %2569 = vmatpush1.bf16.msra.mxu0 %v1980
    %2570 = vmatprep.subr.bf16.mxu0 %v1989
    %2571 = vmatpush1.bf16.msra.mxu0 %v1988
    %2572 = vmatprep.subr.bf16.mxu0 %v1997
    %2573 = vmatpush1.bf16.msra.mxu0 %v1996
    %2574 = vmatprep.subr.bf16.mxu0 %v2005
    %2575 = vmatpush1.bf16.msra.mxu0 %v2004
    %2576 = vmatprep.subr.bf16.mxu0 %v2013
    %2577 = vmatpush1.bf16.msra.mxu0 %v2012
    %2578 = vmatprep.subr.bf16.mxu0 %v2021
    %2579 = vmatpush1.bf16.msra.mxu0 %v2020
    %2580 = vmatprep.subr.bf16.mxu0 %v2029
    %2581 = vmatpush1.bf16.msra.mxu0 %v2028
    %2582 = vmatprep.subr.bf16.mxu0 %v2037
    %2583 = vmatpush1.bf16.msra.mxu0 %v2036
    %2584 = vmatprep.subr.bf16.mxu0 %v2045
    %2585 = vmatpush1.bf16.msra.mxu0 %v2044
    %2586 = vmatprep.subr.bf16.mxu0 %v2053
    %2587 = vmatpush1.bf16.msra.mxu0 %v2052
    %2588 = vmatprep.subr.bf16.mxu0 %v2061
    %2589 = vmatpush1.bf16.msra.mxu0 %v2060
    %2590 = vmatprep.subr.bf16.mxu0 %v2069
    %2591 = vmatpush1.bf16.msra.mxu0 %v2068
    %2592 = vmatprep.subr.bf16.mxu0 %v2077
    %2593 = vmatpush1.bf16.msra.mxu0 %v2076
    %2594 = vmatprep.subr.bf16.mxu0 %v2085
    %2595 = vmatpush1.bf16.msra.mxu0 %v2084
    %2596 = vmatprep.subr.bf16.mxu0 %v2093
    %2597 = vmatpush1.bf16.msra.mxu0 %v2092
    %2598 = vmatprep.mubr.bf16.mxu0 %v555
    %2599 = vmatmul.mubr.bf16.gmra.mrb[0].mxu0 %v541
    %v2600 = vpop.f32.mrb[0].mxu0
    %v2601 = vadd.f32 %v2560, %v2600
    %v2602 = vpop.f32.mrb[0].mxu0
    %v2603 = vadd.f32 %v2562, %v2602
    %v2604 = vpop.f32.mrb[0].mxu0
    %v2605 = vpop.f32.mrb[0].mxu0
    %2606 = vdwg.mxu0
    %2607 = vmatprep.subr.bf16.mxu0 %v1719
    %2608 = vmatpush1.bf16.msra.mxu0 %v1718
    %2609 = vmatprep.subr.bf16.mxu0 %v1727
    %2610 = vmatpush1.bf16.msra.mxu0 %v1726
    %2611 = vmatprep.subr.bf16.mxu0 %v1735
    %2612 = vmatpush1.bf16.msra.mxu0 %v1734
    %2613 = vmatprep.subr.bf16.mxu0 %v1743
    %2614 = vmatpush1.bf16.msra.mxu0 %v1742
    %2615 = vmatprep.subr.bf16.mxu0 %v1751
    %2616 = vmatpush1.bf16.msra.mxu0 %v1750
    %2617 = vmatprep.subr.bf16.mxu0 %v1759
    %2618 = vmatpush1.bf16.msra.mxu0 %v1758
    %2619 = vmatprep.subr.bf16.mxu0 %v1767
    %2620 = vmatpush1.bf16.msra.mxu0 %v1766
    %2621 = vmatprep.subr.bf16.mxu0 %v1775
    %2622 = vmatpush1.bf16.msra.mxu0 %v1774
    %2623 = vmatprep.subr.bf16.mxu0 %v1783
    %2624 = vmatpush1.bf16.msra.mxu0 %v1782
    %2625 = vmatprep.subr.bf16.mxu0 %v1791
    %2626 = vmatpush1.bf16.msra.mxu0 %v1790
    %2627 = vmatprep.subr.bf16.mxu0 %v1799
    %2628 = vmatpush1.bf16.msra.mxu0 %v1798
    %2629 = vmatprep.subr.bf16.mxu0 %v1807
    %2630 = vmatpush1.bf16.msra.mxu0 %v1806
    %2631 = vmatprep.subr.bf16.mxu0 %v1815
    %2632 = vmatpush1.bf16.msra.mxu0 %v1814
    %2633 = vmatprep.subr.bf16.mxu0 %v1823
    %2634 = vmatpush1.bf16.msra.mxu0 %v1822
    %2635 = vmatprep.subr.bf16.mxu0 %v1831
    %2636 = vmatpush1.bf16.msra.mxu0 %v1830
    %2637 = vmatprep.subr.bf16.mxu0 %v1839
    %2638 = vmatpush1.bf16.msra.mxu0 %v1838
    %2639 = vmatprep.mubr.bf16.mxu0 %v548
    %2640 = vmatmul.mubr.bf16.gmra.mrb[0].mxu0 %v534
    %v2641 = vpop.f32.mrb[0].mxu0
    %v2642 = vadd.f32 %v481, %v2641
    %v2643 = vpop.f32.mrb[0].mxu0
    %v2644 = vadd.f32 %v485, %v2643
    %v2645 = vpop.f32.mrb[0].mxu0
    %v2646 = vpop.f32.mrb[0].mxu0
    %2647 = vdwg.mxu0
    %2648 = vmatprep.subr.bf16.mxu0 %v1847
    %2649 = vmatpush1.bf16.msra.mxu0 %v1846
    %2650 = vmatprep.subr.bf16.mxu0 %v1855
    %2651 = vmatpush1.bf16.msra.mxu0 %v1854
    %2652 = vmatprep.subr.bf16.mxu0 %v1863
    %2653 = vmatpush1.bf16.msra.mxu0 %v1862
    %2654 = vmatprep.subr.bf16.mxu0 %v1871
    %2655 = vmatpush1.bf16.msra.mxu0 %v1870
    %2656 = vmatprep.subr.bf16.mxu0 %v1879
    %2657 = vmatpush1.bf16.msra.mxu0 %v1878
    %2658 = vmatprep.subr.bf16.mxu0 %v1887
    %2659 = vmatpush1.bf16.msra.mxu0 %v1886
    %2660 = vmatprep.subr.bf16.mxu0 %v1895
    %2661 = vmatpush1.bf16.msra.mxu0 %v1894
    %2662 = vmatprep.subr.bf16.mxu0 %v1903
    %2663 = vmatpush1.bf16.msra.mxu0 %v1902
    %2664 = vmatprep.subr.bf16.mxu0 %v1911
    %2665 = vmatpush1.bf16.msra.mxu0 %v1910
    %2666 = vmatprep.subr.bf16.mxu0 %v1919
    %2667 = vmatpush1.bf16.msra.mxu0 %v1918
    %2668 = vmatprep.subr.bf16.mxu0 %v1927
    %2669 = vmatpush1.bf16.msra.mxu0 %v1926
    %2670 = vmatprep.subr.bf16.mxu0 %v1935
    %2671 = vmatpush1.bf16.msra.mxu0 %v1934
    %2672 = vmatprep.subr.bf16.mxu0 %v1943
    %2673 = vmatpush1.bf16.msra.mxu0 %v1942
    %2674 = vmatprep.subr.bf16.mxu0 %v1951
    %2675 = vmatpush1.bf16.msra.mxu0 %v1950
    %2676 = vmatprep.subr.bf16.mxu0 %v1959
    %2677 = vmatpush1.bf16.msra.mxu0 %v1958
    %2678 = vmatprep.subr.bf16.mxu0 %v1967
    %2679 = vmatpush1.bf16.msra.mxu0 %v1966
    %2680 = vmatprep.mubr.bf16.mxu0 %v557
    %2681 = vmatmul.mubr.bf16.gmra.mrb[0].mxu0 %v556
    %v2682 = vpop.f32.mrb[0].mxu0
    %v2683 = vadd.f32 %v2642, %v2682
    %v2684 = vpop.f32.mrb[0].mxu0
    %v2685 = vadd.f32 %v2644, %v2684
    %v2686 = vpop.f32.mrb[0].mxu0
    %v2687 = vpop.f32.mrb[0].mxu0
    %2688 = vdwg.mxu0
    %2689 = vmatprep.subr.bf16.mxu0 %v1975
    %2690 = vmatpush1.bf16.msra.mxu0 %v1974
    %2691 = vmatprep.subr.bf16.mxu0 %v1983
    %2692 = vmatpush1.bf16.msra.mxu0 %v1982
    %2693 = vmatprep.subr.bf16.mxu0 %v1991
    %2694 = vmatpush1.bf16.msra.mxu0 %v1990
    %2695 = vmatprep.subr.bf16.mxu0 %v1999
    %2696 = vmatpush1.bf16.msra.mxu0 %v1998
    %2697 = vmatprep.subr.bf16.mxu0 %v2007
    %2698 = vmatpush1.bf16.msra.mxu0 %v2006
    %2699 = vmatprep.subr.bf16.mxu0 %v2015
    %2700 = vmatpush1.bf16.msra.mxu0 %v2014
    %2701 = vmatprep.subr.bf16.mxu0 %v2023
    %2702 = vmatpush1.bf16.msra.mxu0 %v2022
    %2703 = vmatprep.subr.bf16.mxu0 %v2031
    %2704 = vmatpush1.bf16.msra.mxu0 %v2030
    %2705 = vmatprep.subr.bf16.mxu0 %v2039
    %2706 = vmatpush1.bf16.msra.mxu0 %v2038
    %2707 = vmatprep.subr.bf16.mxu0 %v2047
    %2708 = vmatpush1.bf16.msra.mxu0 %v2046
    %2709 = vmatprep.subr.bf16.mxu0 %v2055
    %2710 = vmatpush1.bf16.msra.mxu0 %v2054
    %2711 = vmatprep.subr.bf16.mxu0 %v2063
    %2712 = vmatpush1.bf16.msra.mxu0 %v2062
    %2713 = vmatprep.subr.bf16.mxu0 %v2071
    %2714 = vmatpush1.bf16.msra.mxu0 %v2070
    %2715 = vmatprep.subr.bf16.mxu0 %v2079
    %2716 = vmatpush1.bf16.msra.mxu0 %v2078
    %2717 = vmatprep.subr.bf16.mxu0 %v2087
    %2718 = vmatpush1.bf16.msra.mxu0 %v2086
    %2719 = vmatprep.subr.bf16.mxu0 %v2095
    %2720 = vmatpush1.bf16.msra.mxu0 %v2094
    %2721 = vmatprep.mubr.bf16.mxu0 %v555
    %2722 = vmatmul.mubr.bf16.gmra.mrb[0].mxu0 %v541
    %v2723 = vpop.f32.mrb[0].mxu0
    %v2724 = vadd.f32 %v2683, %v2723
    %v2725 = vpop.f32.mrb[0].mxu0
    %v2726 = vadd.f32 %v2685, %v2725
    %v2727 = vpop.f32.mrb[0].mxu0
    %v2728 = vpop.f32.mrb[0].mxu0
    %2729 = vdwg.mxu0
    %2730 = vmatprep.subr.bf16.mxu0 %v1721
    %2731 = vmatpush1.bf16.msra.mxu0 %v1720
    %2732 = vmatprep.subr.bf16.mxu0 %v1729
    %2733 = vmatpush1.bf16.msra.mxu0 %v1728
    %2734 = vmatprep.subr.bf16.mxu0 %v1737
    %2735 = vmatpush1.bf16.msra.mxu0 %v1736
    %2736 = vmatprep.subr.bf16.mxu0 %v1745
    %2737 = vmatpush1.bf16.msra.mxu0 %v1744
    %2738 = vmatprep.subr.bf16.mxu0 %v1753
    %2739 = vmatpush1.bf16.msra.mxu0 %v1752
    %2740 = vmatprep.subr.bf16.mxu0 %v1761
    %2741 = vmatpush1.bf16.msra.mxu0 %v1760
    %2742 = vmatprep.subr.bf16.mxu0 %v1769
    %2743 = vmatpush1.bf16.msra.mxu0 %v1768
    %2744 = vmatprep.subr.bf16.mxu0 %v1777
    %2745 = vmatpush1.bf16.msra.mxu0 %v1776
    %2746 = vmatprep.subr.bf16.mxu0 %v1785
    %2747 = vmatpush1.bf16.msra.mxu0 %v1784
    %2748 = vmatprep.subr.bf16.mxu0 %v1793
    %2749 = vmatpush1.bf16.msra.mxu0 %v1792
    %2750 = vmatprep.subr.bf16.mxu0 %v1801
    %2751 = vmatpush1.bf16.msra.mxu0 %v1800
    %2752 = vmatprep.subr.bf16.mxu0 %v1809
    %2753 = vmatpush1.bf16.msra.mxu0 %v1808
    %2754 = vmatprep.subr.bf16.mxu0 %v1817
    %2755 = vmatpush1.bf16.msra.mxu0 %v1816
    %2756 = vmatprep.subr.bf16.mxu0 %v1825
    %2757 = vmatpush1.bf16.msra.mxu0 %v1824
    %2758 = vmatprep.subr.bf16.mxu0 %v1833
    %2759 = vmatpush1.bf16.msra.mxu0 %v1832
    %2760 = vmatprep.subr.bf16.mxu0 %v1841
    %2761 = vmatpush1.bf16.msra.mxu0 %v1840
    %2762 = vmatprep.mubr.bf16.mxu0 %v548
    %2763 = vmatmul.mubr.bf16.gmra.mrb[0].mxu0 %v534
    %v2764 = vpop.f32.mrb[0].mxu0
    %v2765 = vadd.f32 %v489, %v2764
    %v2766 = vpop.f32.mrb[0].mxu0
    %v2767 = vadd.f32 %v493, %v2766
    %v2768 = vpop.f32.mrb[0].mxu0
    %v2769 = vpop.f32.mrb[0].mxu0
    %2770 = vdwg.mxu0
    %2771 = vmatprep.subr.bf16.mxu0 %v1849
    %2772 = vmatpush1.bf16.msra.mxu0 %v1848
    %2773 = vmatprep.subr.bf16.mxu0 %v1857
    %2774 = vmatpush1.bf16.msra.mxu0 %v1856
    %2775 = vmatprep.subr.bf16.mxu0 %v1865
    %2776 = vmatpush1.bf16.msra.mxu0 %v1864
    %2777 = vmatprep.subr.bf16.mxu0 %v1873
    %2778 = vmatpush1.bf16.msra.mxu0 %v1872
    %2779 = vmatprep.subr.bf16.mxu0 %v1881
    %2780 = vmatpush1.bf16.msra.mxu0 %v1880
    %2781 = vmatprep.subr.bf16.mxu0 %v1889
    %2782 = vmatpush1.bf16.msra.mxu0 %v1888
    %2783 = vmatprep.subr.bf16.mxu0 %v1897
    %2784 = vmatpush1.bf16.msra.mxu0 %v1896
    %2785 = vmatprep.subr.bf16.mxu0 %v1905
    %2786 = vmatpush1.bf16.msra.mxu0 %v1904
    %2787 = vmatprep.subr.bf16.mxu0 %v1913
    %2788 = vmatpush1.bf16.msra.mxu0 %v1912
    %2789 = vmatprep.subr.bf16.mxu0 %v1921
    %2790 = vmatpush1.bf16.msra.mxu0 %v1920
    %2791 = vmatprep.subr.bf16.mxu0 %v1929
    %2792 = vmatpush1.bf16.msra.mxu0 %v1928
    %2793 = vmatprep.subr.bf16.mxu0 %v1937
    %2794 = vmatpush1.bf16.msra.mxu0 %v1936
    %2795 = vmatprep.subr.bf16.mxu0 %v1945
    %2796 = vmatpush1.bf16.msra.mxu0 %v1944
    %2797 = vmatprep.subr.bf16.mxu0 %v1953
    %2798 = vmatpush1.bf16.msra.mxu0 %v1952
    %2799 = vmatprep.subr.bf16.mxu0 %v1961
    %2800 = vmatpush1.bf16.msra.mxu0 %v1960
    %2801 = vmatprep.subr.bf16.mxu0 %v1969
    %2802 = vmatpush1.bf16.msra.mxu0 %v1968
    %2803 = vmatprep.mubr.bf16.mxu0 %v557
    %2804 = vmatmul.mubr.bf16.gmra.mrb[0].mxu0 %v556
    %v2805 = vpop.f32.mrb[0].mxu0
    %v2806 = vadd.f32 %v2765, %v2805
    %v2807 = vpop.f32.mrb[0].mxu0
    %v2808 = vadd.f32 %v2767, %v2807
    %v2809 = vpop.f32.mrb[0].mxu0
    %v2810 = vpop.f32.mrb[0].mxu0
    %2811 = vdwg.mxu0
    %2812 = vmatprep.subr.bf16.mxu0 %v1977
    %2813 = vmatpush1.bf16.msra.mxu0 %v1976
    %2814 = vmatprep.subr.bf16.mxu0 %v1985
    %2815 = vmatpush1.bf16.msra.mxu0 %v1984
    %2816 = vmatprep.subr.bf16.mxu0 %v1993
    %2817 = vmatpush1.bf16.msra.mxu0 %v1992
    %2818 = vmatprep.subr.bf16.mxu0 %v2001
    %2819 = vmatpush1.bf16.msra.mxu0 %v2000
    %2820 = vmatprep.subr.bf16.mxu0 %v2009
    %2821 = vmatpush1.bf16.msra.mxu0 %v2008
    %2822 = vmatprep.subr.bf16.mxu0 %v2017
    %2823 = vmatpush1.bf16.msra.mxu0 %v2016
    %2824 = vmatprep.subr.bf16.mxu0 %v2025
    %2825 = vmatpush1.bf16.msra.mxu0 %v2024
    %2826 = vmatprep.subr.bf16.mxu0 %v2033
    %2827 = vmatpush1.bf16.msra.mxu0 %v2032
    %2828 = vmatprep.subr.bf16.mxu0 %v2041
    %2829 = vmatpush1.bf16.msra.mxu0 %v2040
    %2830 = vmatprep.subr.bf16.mxu0 %v2049
    %2831 = vmatpush1.bf16.msra.mxu0 %v2048
    %2832 = vmatprep.subr.bf16.mxu0 %v2057
    %2833 = vmatpush1.bf16.msra.mxu0 %v2056
    %2834 = vmatprep.subr.bf16.mxu0 %v2065
    %2835 = vmatpush1.bf16.msra.mxu0 %v2064
    %2836 = vmatprep.subr.bf16.mxu0 %v2073
    %2837 = vmatpush1.bf16.msra.mxu0 %v2072
    %2838 = vmatprep.subr.bf16.mxu0 %v2081
    %2839 = vmatpush1.bf16.msra.mxu0 %v2080
    %2840 = vmatprep.subr.bf16.mxu0 %v2089
    %2841 = vmatpush1.bf16.msra.mxu0 %v2088
    %2842 = vmatprep.subr.bf16.mxu0 %v2097
    %2843 = vmatpush1.bf16.msra.mxu0 %v2096
    %2844 = vmatprep.mubr.bf16.mxu0 %v555
    %2845 = vmatmul.mubr.bf16.gmra.mrb[0].mxu0 %v541
    %v2846 = vpop.f32.mrb[0].mxu0
    %v2847 = vadd.f32 %v2806, %v2846
    %v2848 = vpop.f32.mrb[0].mxu0
    %v2849 = vadd.f32 %v2808, %v2848
    %v2850 = vpop.f32.mrb[0].mxu0
    %v2851 = vpop.f32.mrb[0].mxu0
    %2852 = vdwg.mxu0
    %2853 = vmatprep.subr.bf16.mxu0 %v1723
    %2854 = vmatpush1.bf16.msra.mxu0 %v1722
    %2855 = vmatprep.subr.bf16.mxu0 %v1731
    %2856 = vmatpush1.bf16.msra.mxu0 %v1730
    %2857 = vmatprep.subr.bf16.mxu0 %v1739
    %2858 = vmatpush1.bf16.msra.mxu0 %v1738
    %2859 = vmatprep.subr.bf16.mxu0 %v1747
    %2860 = vmatpush1.bf16.msra.mxu0 %v1746
    %2861 = vmatprep.subr.bf16.mxu0 %v1755
    %2862 = vmatpush1.bf16.msra.mxu0 %v1754
    %2863 = vmatprep.subr.bf16.mxu0 %v1763
    %2864 = vmatpush1.bf16.msra.mxu0 %v1762
    %2865 = vmatprep.subr.bf16.mxu0 %v1771
    %2866 = vmatpush1.bf16.msra.mxu0 %v1770
    %2867 = vmatprep.subr.bf16.mxu0 %v1779
    %2868 = vmatpush1.bf16.msra.mxu0 %v1778
    %2869 = vmatprep.subr.bf16.mxu0 %v1787
    %2870 = vmatpush1.bf16.msra.mxu0 %v1786
    %2871 = vmatprep.subr.bf16.mxu0 %v1795
    %2872 = vmatpush1.bf16.msra.mxu0 %v1794
    %2873 = vmatprep.subr.bf16.mxu0 %v1803
    %2874 = vmatpush1.bf16.msra.mxu0 %v1802
    %2875 = vmatprep.subr.bf16.mxu0 %v1811
    %2876 = vmatpush1.bf16.msra.mxu0 %v1810
    %2877 = vmatprep.subr.bf16.mxu0 %v1819
    %2878 = vmatpush1.bf16.msra.mxu0 %v1818
    %2879 = vmatprep.subr.bf16.mxu0 %v1827
    %2880 = vmatpush1.bf16.msra.mxu0 %v1826
    %2881 = vmatprep.subr.bf16.mxu0 %v1835
    %2882 = vmatpush1.bf16.msra.mxu0 %v1834
    %2883 = vmatprep.subr.bf16.mxu0 %v1843
    %2884 = vmatpush1.bf16.msra.mxu0 %v1842
    %2885 = vmatprep.mubr.bf16.mxu0 %v548
    %2886 = vmatmul.mubr.bf16.gmra.mrb[0].mxu0 %v534
    %v2887 = vpop.f32.mrb[0].mxu0
    %v2888 = vadd.f32 %v497, %v2887
    %v2889 = vpop.f32.mrb[0].mxu0
    %v2890 = vadd.f32 %v501, %v2889
    %v2891 = vpop.f32.mrb[0].mxu0
    %v2892 = vpop.f32.mrb[0].mxu0
    %2893 = vdwg.mxu0
    %2894 = vmatprep.subr.bf16.mxu0 %v1851
    %2895 = vmatpush1.bf16.msra.mxu0 %v1850
    %2896 = vmatprep.subr.bf16.mxu0 %v1859
    %2897 = vmatpush1.bf16.msra.mxu0 %v1858
    %2898 = vmatprep.subr.bf16.mxu0 %v1867
    %2899 = vmatpush1.bf16.msra.mxu0 %v1866
    %2900 = vmatprep.subr.bf16.mxu0 %v1875
    %2901 = vmatpush1.bf16.msra.mxu0 %v1874
    %2902 = vmatprep.subr.bf16.mxu0 %v1883
    %2903 = vmatpush1.bf16.msra.mxu0 %v1882
    %2904 = vmatprep.subr.bf16.mxu0 %v1891
    %2905 = vmatpush1.bf16.msra.mxu0 %v1890
    %2906 = vmatprep.subr.bf16.mxu0 %v1899
    %2907 = vmatpush1.bf16.msra.mxu0 %v1898
    %2908 = vmatprep.subr.bf16.mxu0 %v1907
    %2909 = vmatpush1.bf16.msra.mxu0 %v1906
    %2910 = vmatprep.subr.bf16.mxu0 %v1915
    %2911 = vmatpush1.bf16.msra.mxu0 %v1914
    %2912 = vmatprep.subr.bf16.mxu0 %v1923
    %2913 = vmatpush1.bf16.msra.mxu0 %v1922
    %2914 = vmatprep.subr.bf16.mxu0 %v1931
    %2915 = vmatpush1.bf16.msra.mxu0 %v1930
    %2916 = vmatprep.subr.bf16.mxu0 %v1939
    %2917 = vmatpush1.bf16.msra.mxu0 %v1938
    %2918 = vmatprep.subr.bf16.mxu0 %v1947
    %2919 = vmatpush1.bf16.msra.mxu0 %v1946
    %2920 = vmatprep.subr.bf16.mxu0 %v1955
    %2921 = vmatpush1.bf16.msra.mxu0 %v1954
    %2922 = vmatprep.subr.bf16.mxu0 %v1963
    %2923 = vmatpush1.bf16.msra.mxu0 %v1962
    %2924 = vmatprep.subr.bf16.mxu0 %v1971
    %2925 = vmatpush1.bf16.msra.mxu0 %v1970
    %2926 = vmatprep.mubr.bf16.mxu0 %v557
    %2927 = vmatmul.mubr.bf16.gmra.mrb[0].mxu0 %v556
    %v2928 = vpop.f32.mrb[0].mxu0
    %v2929 = vadd.f32 %v2888, %v2928
    %v2930 = vpop.f32.mrb[0].mxu0
    %v2931 = vadd.f32 %v2890, %v2930
    %v2932 = vpop.f32.mrb[0].mxu0
    %v2933 = vpop.f32.mrb[0].mxu0
    %2934 = vdwg.mxu0
    %2935 = vmatprep.subr.bf16.mxu0 %v1979
    %2936 = vmatpush1.bf16.msra.mxu0 %v1978
    %2937 = vmatprep.subr.bf16.mxu0 %v1987
    %2938 = vmatpush1.bf16.msra.mxu0 %v1986
    %2939 = vmatprep.subr.bf16.mxu0 %v1995
    %2940 = vmatpush1.bf16.msra.mxu0 %v1994
    %2941 = vmatprep.subr.bf16.mxu0 %v2003
    %2942 = vmatpush1.bf16.msra.mxu0 %v2002
    %2943 = vmatprep.subr.bf16.mxu0 %v2011
    %2944 = vmatpush1.bf16.msra.mxu0 %v2010
    %2945 = vmatprep.subr.bf16.mxu0 %v2019
    %2946 = vmatpush1.bf16.msra.mxu0 %v2018
    %2947 = vmatprep.subr.bf16.mxu0 %v2027
    %2948 = vmatpush1.bf16.msra.mxu0 %v2026
    %2949 = vmatprep.subr.bf16.mxu0 %v2035
    %2950 = vmatpush1.bf16.msra.mxu0 %v2034
    %2951 = vmatprep.subr.bf16.mxu0 %v2043
    %2952 = vmatpush1.bf16.msra.mxu0 %v2042
    %2953 = vmatprep.subr.bf16.mxu0 %v2051
    %2954 = vmatpush1.bf16.msra.mxu0 %v2050
    %2955 = vmatprep.subr.bf16.mxu0 %v2059
    %2956 = vmatpush1.bf16.msra.mxu0 %v2058
    %2957 = vmatprep.subr.bf16.mxu0 %v2067
    %2958 = vmatpush1.bf16.msra.mxu0 %v2066
    %2959 = vmatprep.subr.bf16.mxu0 %v2075
    %2960 = vmatpush1.bf16.msra.mxu0 %v2074
    %2961 = vmatprep.subr.bf16.mxu0 %v2083
    %2962 = vmatpush1.bf16.msra.mxu0 %v2082
    %2963 = vmatprep.subr.bf16.mxu0 %v2091
    %2964 = vmatpush1.bf16.msra.mxu0 %v2090
    %2965 = vmatprep.subr.bf16.mxu0 %v2099
    %2966 = vmatpush1.bf16.msra.mxu0 %v2098
    %2967 = vmatprep.mubr.bf16.mxu0 %v555
    %2968 = vmatmul.mubr.bf16.gmra.mrb[0].mxu0 %v541
    %v2969 = vpop.f32.mrb[0].mxu0
    %v2970 = vadd.f32 %v2929, %v2969
    %v2971 = vpop.f32.mrb[0].mxu0
    %v2972 = vadd.f32 %v2931, %v2971
    %v2973 = vpop.f32.mrb[0].mxu0
    %v2974 = vpop.f32.mrb[0].mxu0
    %2975 = vdwg.mxu0
    %vm2976 = vcmp.ge.f32.partialorder %v2601, 0.0
    %vm2977 = vcmp.ge.f32.partialorder %v2603, 0.0
    %vm2978 = vcmp.ge.f32.partialorder %v2724, 0.0
    %vm2979 = vcmp.ge.f32.partialorder %v2726, 0.0
    %vm2980 = vcmp.ge.f32.partialorder %v2847, 0.0
    %vm2981 = vcmp.ge.f32.partialorder %v2849, 0.0
    %vm2982 = vcmp.ge.f32.partialorder %v2970, 0.0
    %vm2983 = vcmp.ge.f32.partialorder %v2972, 0.0
    %v2984 = vmul.f32 %v2601, 0.01
    %v2985 = vmul.f32 %v2603, 0.01
    %v2986 = vmul.f32 %v2724, 0.01
    %v2987 = vmul.f32 %v2726, 0.01
    %v2988 = vmul.f32 %v2847, 0.01
    %v2989 = vmul.f32 %v2849, 0.01
    %v2990 = vmul.f32 %v2970, 0.01
    %v2991 = vmul.f32 %v2972, 0.01
    %v2992 = vsel %vm2976, %v2601, %v2984
    %v2993 = vsel %vm2977, %v2603, %v2985
    %v2994 = vsel %vm2978, %v2724, %v2986
    %v2995 = vsel %vm2979, %v2726, %v2987
    %v2996 = vsel %vm2980, %v2847, %v2988
    %v2997 = vsel %vm2981, %v2849, %v2989
    %v2998 = vsel %vm2982, %v2970, %v2990
    %v2999 = vsel %vm2983, %v2972, %v2991
    %v3000 = vld [vmem:[#allocation2] sm:$0x3]
    %v3001 = vld [vmem:[%s3] sm:$0xff]
    %v3002 = vld [vmem:[%s3 + $0x8] sm:$0xff]
    %v3003 = vld [vmem:[%s3 + $0x10] sm:$0xff]
    %v3004 = vld [vmem:[%s3 + $0x18] sm:$0xff]
    %v3005 = vld [vmem:[%s3 + $0x20] sm:$0xff]
    %v3006 = vld [vmem:[%s3 + $0x28] sm:$0xff]
    %v3007 = vld [vmem:[%s3 + $0x30] sm:$0xff]
    %v3008 = vld [vmem:[%s3 + $0x38] sm:$0xff]
    %v3009 = vld [vmem:[%s3 + $0x40] sm:$0xff]
    %v3010 = vld [vmem:[%s3 + $0x48] sm:$0xff]
    %v3011 = vld [vmem:[%s3 + $0x50] sm:$0xff]
    %v3012 = vld [vmem:[%s3 + $0x58] sm:$0xff]
    %v3013 = vld [vmem:[%s3 + $0x60] sm:$0xff]
    %v3014 = vld [vmem:[%s3 + $0x68] sm:$0xff]
    %v3015 = vld [vmem:[%s3 + $0x70] sm:$0xff]
    %v3016 = vld [vmem:[%s3 + $0x78] sm:$0xff]
    %v3017 = vld [vmem:[%s3 + $0x80] sm:$0xff]
    %v3018 = vld [vmem:[%s3 + $0x88] sm:$0xff]
    %v3019 = vld [vmem:[%s3 + $0x90] sm:$0xff]
    %v3020 = vld [vmem:[%s3 + $0x98] sm:$0xff]
    %v3021 = vld [vmem:[%s3 + $0xa0] sm:$0xff]
    %v3022 = vld [vmem:[%s3 + $0xa8] sm:$0xff]
    %v3023 = vld [vmem:[%s3 + $0xb0] sm:$0xff]
    %v3024 = vld [vmem:[%s3 + $0xb8] sm:$0xff]
    %v3025 = vld [vmem:[%s3 + $0xc0] sm:$0xff]
    %v3026 = vld [vmem:[%s3 + $0xc8] sm:$0xff]
    %v3027 = vld [vmem:[%s3 + $0xd0] sm:$0xff]
    %v3028 = vld [vmem:[%s3 + $0xd8] sm:$0xff]
    %v3029 = vld [vmem:[%s3 + $0xe0] sm:$0xff]
    %v3030 = vld [vmem:[%s3 + $0xe8] sm:$0xff]
    %v3031 = vld [vmem:[%s3 + $0xf0] sm:$0xff]
    %v3032 = vld [vmem:[%s3 + $0xf8] sm:$0xff]
    %v3033 = vld [vmem:[%s3 + $0x100] sm:$0xff]
    %v3034 = vld [vmem:[%s3 + $0x108] sm:$0xff]
    %v3035 = vld [vmem:[%s3 + $0x110] sm:$0xff]
    %v3036 = vld [vmem:[%s3 + $0x118] sm:$0xff]
    %v3037 = vld [vmem:[%s3 + $0x120] sm:$0xff]
    %v3038 = vld [vmem:[%s3 + $0x128] sm:$0xff]
    %v3039 = vld [vmem:[%s3 + $0x130] sm:$0xff]
    %v3040 = vld [vmem:[%s3 + $0x138] sm:$0xff]
    %v3041 = vld [vmem:[%s3 + $0x140] sm:$0xff]
    %v3042 = vld [vmem:[%s3 + $0x148] sm:$0xff]
    %v3043 = vld [vmem:[%s3 + $0x150] sm:$0xff]
    %v3044 = vld [vmem:[%s3 + $0x158] sm:$0xff]
    %v3045 = vld [vmem:[%s3 + $0x160] sm:$0xff]
    %v3046 = vld [vmem:[%s3 + $0x168] sm:$0xff]
    %v3047 = vld [vmem:[%s3 + $0x170] sm:$0xff]
    %v3048 = vld [vmem:[%s3 + $0x178] sm:$0xff]
    %v3049 = vld [vmem:[%s3 + $0x180] sm:$0xff]
    %v3050 = vld [vmem:[%s3 + $0x188] sm:$0xff]
    %v3051 = vld [vmem:[%s3 + $0x190] sm:$0xff]
    %v3052 = vld [vmem:[%s3 + $0x198] sm:$0xff]
    %v3053 = vld [vmem:[%s3 + $0x1a0] sm:$0xff]
    %v3054 = vld [vmem:[%s3 + $0x1a8] sm:$0xff]
    %v3055 = vld [vmem:[%s3 + $0x1b0] sm:$0xff]
    %v3056 = vld [vmem:[%s3 + $0x1b8] sm:$0xff]
    %v3057 = vld [vmem:[%s3 + $0x1c0] sm:$0xff]
    %v3058 = vld [vmem:[%s3 + $0x1c8] sm:$0xff]
    %v3059 = vld [vmem:[%s3 + $0x1d0] sm:$0xff]
    %v3060 = vld [vmem:[%s3 + $0x1d8] sm:$0xff]
    %v3061 = vld [vmem:[%s3 + $0x1e0] sm:$0xff]
    %v3062 = vld [vmem:[%s3 + $0x1e8] sm:$0xff]
    %v3063 = vld [vmem:[%s3 + $0x1f0] sm:$0xff]
    %v3064 = vld [vmem:[%s3 + $0x1f8] sm:$0xff]
    %v3065 = vld [vmem:[%s3 + $0x200] sm:$0xff]
    %v3066 = vld [vmem:[%s3 + $0x208] sm:$0xff]
    %v3067 = vld [vmem:[%s3 + $0x210] sm:$0xff]
    %v3068 = vld [vmem:[%s3 + $0x218] sm:$0xff]
    %v3069 = vld [vmem:[%s3 + $0x220] sm:$0xff]
    %v3070 = vld [vmem:[%s3 + $0x228] sm:$0xff]
    %v3071 = vld [vmem:[%s3 + $0x230] sm:$0xff]
    %v3072 = vld [vmem:[%s3 + $0x238] sm:$0xff]
    %v3073 = vld [vmem:[%s3 + $0x240] sm:$0xff]
    %v3074 = vld [vmem:[%s3 + $0x248] sm:$0xff]
    %v3075 = vld [vmem:[%s3 + $0x250] sm:$0xff]
    %v3076 = vld [vmem:[%s3 + $0x258] sm:$0xff]
    %v3077 = vld [vmem:[%s3 + $0x260] sm:$0xff]
    %v3078 = vld [vmem:[%s3 + $0x268] sm:$0xff]
    %v3079 = vld [vmem:[%s3 + $0x270] sm:$0xff]
    %v3080 = vld [vmem:[%s3 + $0x278] sm:$0xff]
    %v3081 = vld [vmem:[%s3 + $0x280] sm:$0xff]
    %v3082 = vld [vmem:[%s3 + $0x288] sm:$0xff]
    %v3083 = vld [vmem:[%s3 + $0x290] sm:$0xff]
    %v3084 = vld [vmem:[%s3 + $0x298] sm:$0xff]
    %v3085 = vld [vmem:[%s3 + $0x2a0] sm:$0xff]
    %v3086 = vld [vmem:[%s3 + $0x2a8] sm:$0xff]
    %v3087 = vld [vmem:[%s3 + $0x2b0] sm:$0xff]
    %v3088 = vld [vmem:[%s3 + $0x2b8] sm:$0xff]
    %v3089 = vld [vmem:[%s3 + $0x2c0] sm:$0xff]
    %v3090 = vld [vmem:[%s3 + $0x2c8] sm:$0xff]
    %v3091 = vld [vmem:[%s3 + $0x2d0] sm:$0xff]
    %v3092 = vld [vmem:[%s3 + $0x2d8] sm:$0xff]
    %v3093 = vld [vmem:[%s3 + $0x2e0] sm:$0xff]
    %v3094 = vld [vmem:[%s3 + $0x2e8] sm:$0xff]
    %v3095 = vld [vmem:[%s3 + $0x2f0] sm:$0xff]
    %v3096 = vld [vmem:[%s3 + $0x2f8] sm:$0xff]
    %v3097 = vld [vmem:[%s3 + $0x300] sm:$0xff]
    %v3098 = vld [vmem:[%s3 + $0x308] sm:$0xff]
    %v3099 = vld [vmem:[%s3 + $0x310] sm:$0xff]
    %v3100 = vld [vmem:[%s3 + $0x318] sm:$0xff]
    %v3101 = vld [vmem:[%s3 + $0x320] sm:$0xff]
    %v3102 = vld [vmem:[%s3 + $0x328] sm:$0xff]
    %v3103 = vld [vmem:[%s3 + $0x330] sm:$0xff]
    %v3104 = vld [vmem:[%s3 + $0x338] sm:$0xff]
    %v3105 = vld [vmem:[%s3 + $0x340] sm:$0xff]
    %v3106 = vld [vmem:[%s3 + $0x348] sm:$0xff]
    %v3107 = vld [vmem:[%s3 + $0x350] sm:$0xff]
    %v3108 = vld [vmem:[%s3 + $0x358] sm:$0xff]
    %v3109 = vld [vmem:[%s3 + $0x360] sm:$0xff]
    %v3110 = vld [vmem:[%s3 + $0x368] sm:$0xff]
    %v3111 = vld [vmem:[%s3 + $0x370] sm:$0xff]
    %v3112 = vld [vmem:[%s3 + $0x378] sm:$0xff]
    %v3113 = vld [vmem:[%s3 + $0x380] sm:$0xff]
    %v3114 = vld [vmem:[%s3 + $0x388] sm:$0xff]
    %v3115 = vld [vmem:[%s3 + $0x390] sm:$0xff]
    %v3116 = vld [vmem:[%s3 + $0x398] sm:$0xff]
    %v3117 = vld [vmem:[%s3 + $0x3a0] sm:$0xff]
    %v3118 = vld [vmem:[%s3 + $0x3a8] sm:$0xff]
    %v3119 = vld [vmem:[%s3 + $0x3b0] sm:$0xff]
    %v3120 = vld [vmem:[%s3 + $0x3b8] sm:$0xff]
    %v3121 = vld [vmem:[%s3 + $0x3c0] sm:$0xff]
    %v3122 = vld [vmem:[%s3 + $0x3c8] sm:$0xff]
    %v3123 = vld [vmem:[%s3 + $0x3d0] sm:$0xff]
    %v3124 = vld [vmem:[%s3 + $0x3d8] sm:$0xff]
    %v3125 = vld [vmem:[%s3 + $0x3e0] sm:$0xff]
    %v3126 = vld [vmem:[%s3 + $0x3e8] sm:$0xff]
    %v3127 = vld [vmem:[%s3 + $0x3f0] sm:$0xff]
    %v3128 = vld [vmem:[%s3 + $0x3f8] sm:$0xff]
    %3129 = vmatprep.subr.mxu0 0.0
    %3130 = vmatpush1.msra.mxu0 %v3001
    %3131 = vmatprep.subr.mxu0 0.0
    %3132 = vmatpush1.msra.mxu0 %v3002
    %3133 = vmatprep.subr.mxu0 0.0
    %3134 = vmatpush1.msra.mxu0 %v3003
    %3135 = vmatprep.subr.mxu0 0.0
    %3136 = vmatpush1.msra.mxu0 %v3004
    %3137 = vmatprep.subr.mxu0 0.0
    %3138 = vmatpush1.msra.mxu0 %v3005
    %3139 = vmatprep.subr.mxu0 0.0
    %3140 = vmatpush1.msra.mxu0 %v3006
    %3141 = vmatprep.subr.mxu0 0.0
    %3142 = vmatpush1.msra.mxu0 %v3007
    %3143 = vmatprep.subr.mxu0 0.0
    %3144 = vmatpush1.msra.mxu0 %v3008
    %3145 = vmatprep.subr.mxu0 0.0
    %3146 = vmatpush1.msra.mxu0 %v3009
    %3147 = vmatprep.subr.mxu0 0.0
    %3148 = vmatpush1.msra.mxu0 %v3010
    %3149 = vmatprep.subr.mxu0 0.0
    %3150 = vmatpush1.msra.mxu0 %v3011
    %3151 = vmatprep.subr.mxu0 0.0
    %3152 = vmatpush1.msra.mxu0 %v3012
    %3153 = vmatprep.subr.mxu0 0.0
    %3154 = vmatpush1.msra.mxu0 %v3013
    %3155 = vmatprep.subr.mxu0 0.0
    %3156 = vmatpush1.msra.mxu0 %v3014
    %3157 = vmatprep.subr.mxu0 0.0
    %3158 = vmatpush1.msra.mxu0 %v3015
    %3159 = vmatprep.subr.mxu0 0.0
    %3160 = vmatpush1.msra.mxu0 %v3016
    %3161 = vmatprep.subr.mxu0 0.0
    %3162 = vmatpush1.msra.mxu0 %v3017
    %3163 = vmatprep.subr.mxu0 0.0
    %3164 = vmatpush1.msra.mxu0 %v3018
    %3165 = vmatprep.subr.mxu0 0.0
    %3166 = vmatpush1.msra.mxu0 %v3019
    %3167 = vmatprep.subr.mxu0 0.0
    %3168 = vmatpush1.msra.mxu0 %v3020
    %3169 = vmatprep.subr.mxu0 0.0
    %3170 = vmatpush1.msra.mxu0 %v3021
    %3171 = vmatprep.subr.mxu0 0.0
    %3172 = vmatpush1.msra.mxu0 %v3022
    %3173 = vmatprep.subr.mxu0 0.0
    %3174 = vmatpush1.msra.mxu0 %v3023
    %3175 = vmatprep.subr.mxu0 0.0
    %3176 = vmatpush1.msra.mxu0 %v3024
    %3177 = vmatprep.subr.mxu0 0.0
    %3178 = vmatpush1.msra.mxu0 %v3025
    %3179 = vmatprep.subr.mxu0 0.0
    %3180 = vmatpush1.msra.mxu0 %v3026
    %3181 = vmatprep.subr.mxu0 0.0
    %3182 = vmatpush1.msra.mxu0 %v3027
    %3183 = vmatprep.subr.mxu0 0.0
    %3184 = vmatpush1.msra.mxu0 %v3028
    %3185 = vmatprep.subr.mxu0 0.0
    %3186 = vmatpush1.msra.mxu0 %v3029
    %3187 = vmatprep.subr.mxu0 0.0
    %3188 = vmatpush1.msra.mxu0 %v3030
    %3189 = vmatprep.subr.mxu0 0.0
    %3190 = vmatpush1.msra.mxu0 %v3031
    %3191 = vmatprep.subr.mxu0 0.0
    %3192 = vmatpush1.msra.mxu0 %v3032
    %3193 = vmatprep.mubr.f32.mxu0 %v2993
    %3194 = vmatmul.mubr.f32.gmra.mrb[0].mxu0 %v2992
    %v3195 = vpop.f32.mrb[0].mxu0
    %v3196 = vadd.f32 0.0, %v3195
    %v3197 = vpop.f32.mrb[0].mxu0
    %3198 = vdwg.mxu0
    %3199 = vmatprep.subr.mxu0 0.0
    %3200 = vmatpush1.msra.mxu0 %v3033
    %3201 = vmatprep.subr.mxu0 0.0
    %3202 = vmatpush1.msra.mxu0 %v3034
    %3203 = vmatprep.subr.mxu0 0.0
    %3204 = vmatpush1.msra.mxu0 %v3035
    %3205 = vmatprep.subr.mxu0 0.0
    %3206 = vmatpush1.msra.mxu0 %v3036
    %3207 = vmatprep.subr.mxu0 0.0
    %3208 = vmatpush1.msra.mxu0 %v3037
    %3209 = vmatprep.subr.mxu0 0.0
    %3210 = vmatpush1.msra.mxu0 %v3038
    %3211 = vmatprep.subr.mxu0 0.0
    %3212 = vmatpush1.msra.mxu0 %v3039
    %3213 = vmatprep.subr.mxu0 0.0
    %3214 = vmatpush1.msra.mxu0 %v3040
    %3215 = vmatprep.subr.mxu0 0.0
    %3216 = vmatpush1.msra.mxu0 %v3041
    %3217 = vmatprep.subr.mxu0 0.0
    %3218 = vmatpush1.msra.mxu0 %v3042
    %3219 = vmatprep.subr.mxu0 0.0
    %3220 = vmatpush1.msra.mxu0 %v3043
    %3221 = vmatprep.subr.mxu0 0.0
    %3222 = vmatpush1.msra.mxu0 %v3044
    %3223 = vmatprep.subr.mxu0 0.0
    %3224 = vmatpush1.msra.mxu0 %v3045
    %3225 = vmatprep.subr.mxu0 0.0
    %3226 = vmatpush1.msra.mxu0 %v3046
    %3227 = vmatprep.subr.mxu0 0.0
    %3228 = vmatpush1.msra.mxu0 %v3047
    %3229 = vmatprep.subr.mxu0 0.0
    %3230 = vmatpush1.msra.mxu0 %v3048
    %3231 = vmatprep.subr.mxu0 0.0
    %3232 = vmatpush1.msra.mxu0 %v3049
    %3233 = vmatprep.subr.mxu0 0.0
    %3234 = vmatpush1.msra.mxu0 %v3050
    %3235 = vmatprep.subr.mxu0 0.0
    %3236 = vmatpush1.msra.mxu0 %v3051
    %3237 = vmatprep.subr.mxu0 0.0
    %3238 = vmatpush1.msra.mxu0 %v3052
    %3239 = vmatprep.subr.mxu0 0.0
    %3240 = vmatpush1.msra.mxu0 %v3053
    %3241 = vmatprep.subr.mxu0 0.0
    %3242 = vmatpush1.msra.mxu0 %v3054
    %3243 = vmatprep.subr.mxu0 0.0
    %3244 = vmatpush1.msra.mxu0 %v3055
    %3245 = vmatprep.subr.mxu0 0.0
    %3246 = vmatpush1.msra.mxu0 %v3056
    %3247 = vmatprep.subr.mxu0 0.0
    %3248 = vmatpush1.msra.mxu0 %v3057
    %3249 = vmatprep.subr.mxu0 0.0
    %3250 = vmatpush1.msra.mxu0 %v3058
    %3251 = vmatprep.subr.mxu0 0.0
    %3252 = vmatpush1.msra.mxu0 %v3059
    %3253 = vmatprep.subr.mxu0 0.0
    %3254 = vmatpush1.msra.mxu0 %v3060
    %3255 = vmatprep.subr.mxu0 0.0
    %3256 = vmatpush1.msra.mxu0 %v3061
    %3257 = vmatprep.subr.mxu0 0.0
    %3258 = vmatpush1.msra.mxu0 %v3062
    %3259 = vmatprep.subr.mxu0 0.0
    %3260 = vmatpush1.msra.mxu0 %v3063
    %3261 = vmatprep.subr.mxu0 0.0
    %3262 = vmatpush1.msra.mxu0 %v3064
    %3263 = vmatprep.mubr.f32.mxu0 %v2995
    %3264 = vmatmul.mubr.f32.gmra.mrb[0].mxu0 %v2994
    %v3265 = vpop.f32.mrb[0].mxu0
    %v3266 = vadd.f32 %v3196, %v3265
    %v3267 = vpop.f32.mrb[0].mxu0
    %3268 = vdwg.mxu0
    %3269 = vmatprep.subr.mxu0 0.0
    %3270 = vmatpush1.msra.mxu0 %v3065
    %3271 = vmatprep.subr.mxu0 0.0
    %3272 = vmatpush1.msra.mxu0 %v3066
    %3273 = vmatprep.subr.mxu0 0.0
    %3274 = vmatpush1.msra.mxu0 %v3067
    %3275 = vmatprep.subr.mxu0 0.0
    %3276 = vmatpush1.msra.mxu0 %v3068
    %3277 = vmatprep.subr.mxu0 0.0
    %3278 = vmatpush1.msra.mxu0 %v3069
    %3279 = vmatprep.subr.mxu0 0.0
    %3280 = vmatpush1.msra.mxu0 %v3070
    %3281 = vmatprep.subr.mxu0 0.0
    %3282 = vmatpush1.msra.mxu0 %v3071
    %3283 = vmatprep.subr.mxu0 0.0
    %3284 = vmatpush1.msra.mxu0 %v3072
    %3285 = vmatprep.subr.mxu0 0.0
    %3286 = vmatpush1.msra.mxu0 %v3073
    %3287 = vmatprep.subr.mxu0 0.0
    %3288 = vmatpush1.msra.mxu0 %v3074
    %3289 = vmatprep.subr.mxu0 0.0
    %3290 = vmatpush1.msra.mxu0 %v3075
    %3291 = vmatprep.subr.mxu0 0.0
    %3292 = vmatpush1.msra.mxu0 %v3076
    %3293 = vmatprep.subr.mxu0 0.0
    %3294 = vmatpush1.msra.mxu0 %v3077
    %3295 = vmatprep.subr.mxu0 0.0
    %3296 = vmatpush1.msra.mxu0 %v3078
    %3297 = vmatprep.subr.mxu0 0.0
    %3298 = vmatpush1.msra.mxu0 %v3079
    %3299 = vmatprep.subr.mxu0 0.0
    %3300 = vmatpush1.msra.mxu0 %v3080
    %3301 = vmatprep.subr.mxu0 0.0
    %3302 = vmatpush1.msra.mxu0 %v3081
    %3303 = vmatprep.subr.mxu0 0.0
    %3304 = vmatpush1.msra.mxu0 %v3082
    %3305 = vmatprep.subr.mxu0 0.0
    %3306 = vmatpush1.msra.mxu0 %v3083
    %3307 = vmatprep.subr.mxu0 0.0
    %3308 = vmatpush1.msra.mxu0 %v3084
    %3309 = vmatprep.subr.mxu0 0.0
    %3310 = vmatpush1.msra.mxu0 %v3085
    %3311 = vmatprep.subr.mxu0 0.0
    %3312 = vmatpush1.msra.mxu0 %v3086
    %3313 = vmatprep.subr.mxu0 0.0
    %3314 = vmatpush1.msra.mxu0 %v3087
    %3315 = vmatprep.subr.mxu0 0.0
    %3316 = vmatpush1.msra.mxu0 %v3088
    %3317 = vmatprep.subr.mxu0 0.0
    %3318 = vmatpush1.msra.mxu0 %v3089
    %3319 = vmatprep.subr.mxu0 0.0
    %3320 = vmatpush1.msra.mxu0 %v3090
    %3321 = vmatprep.subr.mxu0 0.0
    %3322 = vmatpush1.msra.mxu0 %v3091
    %3323 = vmatprep.subr.mxu0 0.0
    %3324 = vmatpush1.msra.mxu0 %v3092
    %3325 = vmatprep.subr.mxu0 0.0
    %3326 = vmatpush1.msra.mxu0 %v3093
    %3327 = vmatprep.subr.mxu0 0.0
    %3328 = vmatpush1.msra.mxu0 %v3094
    %3329 = vmatprep.subr.mxu0 0.0
    %3330 = vmatpush1.msra.mxu0 %v3095
    %3331 = vmatprep.subr.mxu0 0.0
    %3332 = vmatpush1.msra.mxu0 %v3096
    %3333 = vmatprep.mubr.f32.mxu0 %v2997
    %3334 = vmatmul.mubr.f32.gmra.mrb[0].mxu0 %v2996
    %v3335 = vpop.f32.mrb[0].mxu0
    %v3336 = vadd.f32 %v3266, %v3335
    %v3337 = vpop.f32.mrb[0].mxu0
    %3338 = vdwg.mxu0
    %3339 = vmatprep.subr.mxu0 0.0
    %3340 = vmatpush1.msra.mxu0 %v3097
    %3341 = vmatprep.subr.mxu0 0.0
    %3342 = vmatpush1.msra.mxu0 %v3098
    %3343 = vmatprep.subr.mxu0 0.0
    %3344 = vmatpush1.msra.mxu0 %v3099
    %3345 = vmatprep.subr.mxu0 0.0
    %3346 = vmatpush1.msra.mxu0 %v3100
    %3347 = vmatprep.subr.mxu0 0.0
    %3348 = vmatpush1.msra.mxu0 %v3101
    %3349 = vmatprep.subr.mxu0 0.0
    %3350 = vmatpush1.msra.mxu0 %v3102
    %3351 = vmatprep.subr.mxu0 0.0
    %3352 = vmatpush1.msra.mxu0 %v3103
    %3353 = vmatprep.subr.mxu0 0.0
    %3354 = vmatpush1.msra.mxu0 %v3104
    %3355 = vmatprep.subr.mxu0 0.0
    %3356 = vmatpush1.msra.mxu0 %v3105
    %3357 = vmatprep.subr.mxu0 0.0
    %3358 = vmatpush1.msra.mxu0 %v3106
    %3359 = vmatprep.subr.mxu0 0.0
    %3360 = vmatpush1.msra.mxu0 %v3107
    %3361 = vmatprep.subr.mxu0 0.0
    %3362 = vmatpush1.msra.mxu0 %v3108
    %3363 = vmatprep.subr.mxu0 0.0
    %3364 = vmatpush1.msra.mxu0 %v3109
    %3365 = vmatprep.subr.mxu0 0.0
    %3366 = vmatpush1.msra.mxu0 %v3110
    %3367 = vmatprep.subr.mxu0 0.0
    %3368 = vmatpush1.msra.mxu0 %v3111
    %3369 = vmatprep.subr.mxu0 0.0
    %3370 = vmatpush1.msra.mxu0 %v3112
    %3371 = vmatprep.subr.mxu0 0.0
    %3372 = vmatpush1.msra.mxu0 %v3113
    %3373 = vmatprep.subr.mxu0 0.0
    %3374 = vmatpush1.msra.mxu0 %v3114
    %3375 = vmatprep.subr.mxu0 0.0
    %3376 = vmatpush1.msra.mxu0 %v3115
    %3377 = vmatprep.subr.mxu0 0.0
    %3378 = vmatpush1.msra.mxu0 %v3116
    %3379 = vmatprep.subr.mxu0 0.0
    %3380 = vmatpush1.msra.mxu0 %v3117
    %3381 = vmatprep.subr.mxu0 0.0
    %3382 = vmatpush1.msra.mxu0 %v3118
    %3383 = vmatprep.subr.mxu0 0.0
    %3384 = vmatpush1.msra.mxu0 %v3119
    %3385 = vmatprep.subr.mxu0 0.0
    %3386 = vmatpush1.msra.mxu0 %v3120
    %3387 = vmatprep.subr.mxu0 0.0
    %3388 = vmatpush1.msra.mxu0 %v3121
    %3389 = vmatprep.subr.mxu0 0.0
    %3390 = vmatpush1.msra.mxu0 %v3122
    %3391 = vmatprep.subr.mxu0 0.0
    %3392 = vmatpush1.msra.mxu0 %v3123
    %3393 = vmatprep.subr.mxu0 0.0
    %3394 = vmatpush1.msra.mxu0 %v3124
    %3395 = vmatprep.subr.mxu0 0.0
    %3396 = vmatpush1.msra.mxu0 %v3125
    %3397 = vmatprep.subr.mxu0 0.0
    %3398 = vmatpush1.msra.mxu0 %v3126
    %3399 = vmatprep.subr.mxu0 0.0
    %3400 = vmatpush1.msra.mxu0 %v3127
    %3401 = vmatprep.subr.mxu0 0.0
    %3402 = vmatpush1.msra.mxu0 %v3128
    %3403 = vmatprep.mubr.f32.mxu0 %v2999
    %3404 = vmatmul.mubr.f32.gmra.mrb[0].mxu0 %v2998
    %v3405 = vpop.f32.mrb[0].mxu0
    %v3406 = vadd.f32 %v3336, %v3405
    %v3407 = vpop.f32.mrb[0].mxu0
    %3408 = vdwg.mxu0
    %v3409 = vadd.f32 %v3000, %v3406
    %vm3410 = vcmask 9216
    %3411 = vst.msk [vmem:[#allocation2] sm:$0x3] %vm3410, %v3409
    // Predicated region
    $region42: #{tpu_custom_call.1} parent=1 // pred_check
      %p3412 = pneg %p70
    $region43: #{tpu_custom_call.1} parent=1 // pred_check_branch
      %3414 = sbr.rel (%p3412) target = $region45
    $region44: #{tpu_custom_call.1} parent=1 // pred_region
      %v3415 = vld [vmem:[#allocation2] sm:$0x3]
      %3416 = vst.msk [vmem:[#allocation11] sm:$0x3] %vm3410, %v3415
    $region45: #{tpu_custom_call.1} parent=1 // pred_fallthru
      _
    // Predicated region
    $region46: #{tpu_custom_call.1} parent=1 // pred_check
      _
    $region47: #{tpu_custom_call.1} parent=1 // pred_check_branch
      %3418 = sbr.rel (0) target = $region49
    $region48: #{tpu_custom_call.1} parent=1 // pred_region
      %s3420 = ssub.s32 32, 32
      %3421 = vsyncadd [#allocation5], %s3420
      %s3423 = sshll.u32 [#allocation11], 4
      %s3424 = int_to_ptr.vmem [resolvable:$true] %s3423
      %3426 = dma.vmem_to_hbm [thread:$0]  %s3424, 32, %s5, [#allocation5]
    $region49: #{tpu_custom_call.1} parent=1 // pred_fallthru
      _
    // Predicated region
    $region50: #{tpu_custom_call.1} parent=1 // pred_check
      _
    $region51: #{tpu_custom_call.1} parent=1 // pred_check_branch
      %3428 = sbr.rel (0) target = $region53
    $region52: #{tpu_custom_call.1} parent=1 // pred_region
      %3429 = dma.done [#allocation5], 32
    $region53: #{tpu_custom_call.1} parent=1 // pred_fallthru
      _
    %3430 = vsyncpa [#allocation4], 1
    %3431 = vsyncpa [#allocation7], 1
    %3432 = vsyncpa [#allocation10], 1
    %3433 = vsyncpa [#allocation5], 1

</llo_original>
